<compile_context>
chip_gen: v7x
topology: tpu7x:2x2x1
jax: 0.10.0
libtpu: 0.0.40
codegen_flags: <defaults>
</compile_context>

<pallas_src>
import functools

import jax
import jax.numpy as jnp
from jax.experimental import pallas as pl
from jax.experimental.pallas import tpu as pltpu

BN_EPS = 1e-5


# ----------------------------------------------------------------------------
# Fused kernel: Conv2d(no bias) + BatchNorm2d(affine=False, batch stats) + ReLU
# ----------------------------------------------------------------------------
def _conv_bn_relu_kernel(ksize, out_h, out_w, relu, xp_ref, w_ref, o_ref):
    """
    xp_ref : (N, H + 2*pad, W + 2*pad, Cin)  zero-padded NHWC input   (VMEM)
    w_ref  : (ksize*ksize, Cout, Cin)        conv weight, tap-major   (VMEM)
    o_ref  : (Cout, N*H*W)                   lane-dense output slab   (VMEM)
    """
    n = xp_ref.shape[0]
    cin = xp_ref.shape[3]
    cout = w_ref.shape[1]
    nhw = n * out_h * out_w

    xp = xp_ref[...]                                      # single VMEM load
    acc = jnp.zeros((cout, nhw), jnp.float32)

    # In-kernel im2col: 9 (or 1) statically shifted windows, each one MXU matmul
    # accumulated in f32.  Output is the transposed (Cout, NHW) form so both the
    # MXU N dimension and the stores are lane-dense.
    for t in range(ksize * ksize):
        dy, dx = t // ksize, t % ksize
        piece = xp[:, dy:dy + out_h, dx:dx + out_w, :].reshape(nhw, cin)
        acc = acc + jax.lax.dot_general(
            w_ref[t], piece,
            dimension_numbers=(((1,), (1,)), ((), ())),    # w_tap @ piece^T
            preferred_element_type=jnp.float32)

    # BatchNorm2d(affine=False), training mode: per-channel biased batch stats
    # over (N, H, W) -- the lane axis here.
    mean = jnp.mean(acc, axis=1, keepdims=True)
    var = jnp.mean(jnp.square(acc - mean), axis=1, keepdims=True)
    y = (acc - mean) * jax.lax.rsqrt(var + BN_EPS)
    if relu:
        y = jnp.maximum(y, 0.0)
    o_ref[...] = y
    # TODO(synk): BatchNorm running_mean/running_var updates (training-time side
    # effect) are not reproduced; they do not affect the forward output.


# ----------------------------------------------------------------------------
# Wrapper: PyTorch-facing ConvBlock.forward (NCHW in, NCHW out)
# ----------------------------------------------------------------------------
def conv_block(x_nchw, weight, *, kernel_size, relu=True):
    """x_nchw: (N, Cin, H, W); weight: (Cout, Cin, k, k) torch layout."""
    assert kernel_size in (1, 3)
    n, cin, h, w = x_nchw.shape
    cout = weight.shape[0]

    # NCHW -> NHWC (canonical TPU conv layout) + zero padding for the 3x3 case.
    x = jnp.transpose(x_nchw, (0, 2, 3, 1)).astype(jnp.float32)
    if kernel_size == 3:
        x = jnp.pad(x, ((0, 0), (1, 1), (1, 1), (0, 0)))

    # (Cout, Cin, k, k) -> (k*k, Cout, Cin); tap index t = dy*k + dx.
    w_taps = jnp.transpose(weight.astype(jnp.float32), (2, 3, 0, 1)).reshape(
        kernel_size * kernel_size, cout, cin)

    kernel = functools.partial(_conv_bn_relu_kernel, kernel_size, h, w, relu)
    y_t = pl.pallas_call(
        kernel,
        out_shape=jax.ShapeDtypeStruct((cout, n * h * w), jnp.float32),
        in_specs=[pl.BlockSpec(memory_space=pltpu.MemorySpace.VMEM),
                  pl.BlockSpec(memory_space=pltpu.MemorySpace.VMEM)],
        out_specs=pl.BlockSpec(memory_space=pltpu.MemorySpace.VMEM),
    )(x, w_taps)

    # Lane-dense (Cout, N*H*W) slab -> NCHW output (layout plumbing only).
    return jnp.transpose(y_t.reshape(cout, n, h, w), (1, 0, 2, 3))


# ----------------------------------------------------------------------------
# Pure-JAX reference for a numerical sanity check
# ----------------------------------------------------------------------------
def _reference(x_nchw, weight, kernel_size, relu):
    dn = jax.lax.conv_dimension_numbers(x_nchw.shape, weight.shape,
                                        ("NCHW", "OIHW", "NCHW"))
    y = jax.lax.conv_general_dilated(
        x_nchw.astype(jnp.float32), weight.astype(jnp.float32),
        window_strides=(1, 1),
        padding="SAME" if kernel_size == 3 else "VALID",
        dimension_numbers=dn,
        precision=jax.lax.Precision.HIGHEST)
    mean = jnp.mean(y, axis=(0, 2, 3), keepdims=True)
    var = jnp.mean(jnp.square(y - mean), axis=(0, 2, 3), keepdims=True)
    y = (y - mean) * jax.lax.rsqrt(var + BN_EPS)
    return jnp.maximum(y, 0.0) if relu else y


# ----------------------------------------------------------------------------
# Main
# ----------------------------------------------------------------------------
if __name__ == "__main__":
    key = jax.random.PRNGKey(0)
    k_x, k_w3, k_w1 = jax.random.split(key, 3)

    n, cin, h, w = 2, 4, 16, 16
    cout = 16

    x = jax.random.normal(k_x, (n, cin, h, w), jnp.float32)
    # kaiming_normal_(mode='fan_out', nonlinearity='relu'): std = sqrt(2 / (cout*k*k))
    w3 = jax.random.normal(k_w3, (cout, cin, 3, 3), jnp.float32) * (2.0 / (cout * 9)) ** 0.5
    w1 = jax.random.normal(k_w1, (cout, cout, 1, 1), jnp.float32) * (2.0 / cout) ** 0.5

    fwd3 = jax.jit(functools.partial(conv_block, kernel_size=3, relu=True))
    fwd1 = jax.jit(functools.partial(conv_block, kernel_size=1, relu=False))

    y3 = fwd3(x, w3)        # ConvBlock(4 -> 16, k=3, relu=True)
    y1 = fwd1(y3, w1)       # ConvBlock(16 -> 16, k=1, relu=False)
    jax.block_until_ready((y3, y1))

    assert y3.shape == (n, cout, h, w)
    assert y1.shape == (n, cout, h, w)

    # Numerical sanity check against the plain-XLA reference.
    r3 = _reference(x, w3, 3, True)
    r1 = _reference(y3, w1, 1, False)
    err3 = float(jnp.max(jnp.abs(y3 - r3)))
    err1 = float(jnp.max(jnp.abs(y1 - r1)))
    assert err3 < 3e-2 and err1 < 3e-2, (err3, err1)

    print("KERNEL_OK")
</pallas_src>

<mosaic_0001>
module attributes {stable_mosaic.version = 11 : i64} {
  func.func @_conv_bn_relu_kernel(%arg0: memref<2x18x18x4xf32, #tpu.memory_space<vmem>>, %arg1: memref<9x16x4xf32, #tpu.memory_space<vmem>>, %arg2: memref<16x512xf32, #tpu.memory_space<vmem>>) attributes {dimension_semantics = [], scalar_prefetch = 0 : i64, scratch_operands = 0 : i64, tpu.core_type = #tpu.core_type<tc>} {
    %c0 = arith.constant 0 : index
    %c0_0 = arith.constant 0 : index
    %c0_1 = arith.constant 0 : index
    %c0_2 = arith.constant 0 : index
    %0 = vector.load %arg0[%c0, %c0_0, %c0_1, %c0_2] : memref<2x18x18x4xf32, #tpu.memory_space<vmem>>, vector<2x18x18x4xf32>
    %cst = arith.constant 0.000000e+00 : f32
    %1 = vector.broadcast %cst : f32 to vector<16x512xf32>
    %2 = vector.extract_strided_slice %0 {offsets = [0, 0, 0, 0], sizes = [2, 16, 16, 4], strides = [1, 1, 1, 1]} : vector<2x18x18x4xf32> to vector<2x16x16x4xf32>
    %3 = vector.shape_cast %2 : vector<2x16x16x4xf32> to vector<512x4xf32>
    %c0_3 = arith.constant 0 : index
    %c0_4 = arith.constant 0 : index
    %c0_5 = arith.constant 0 : index
    %4 = vector.load %arg1[%c0_3, %c0_4, %c0_5] : memref<9x16x4xf32, #tpu.memory_space<vmem>>, vector<1x16x4xf32>
    %5 = vector.shape_cast %4 : vector<1x16x4xf32> to vector<16x4xf32>
    %cst_6 = arith.constant dense<0.000000e+00> : vector<16x512xf32>
    %6 = tpu.matmul %5, %3, %cst_6 {dimension_numbers = #tpu.dot_dimension_numbers<[1], [1], [0], [0], [0, 0, 1, 0], [], []>} : vector<16x4xf32>, vector<512x4xf32>, vector<16x512xf32> -> vector<16x512xf32>
    %7 = arith.addf %1, %6 : vector<16x512xf32>
    %8 = vector.extract_strided_slice %0 {offsets = [0, 0, 1, 0], sizes = [2, 16, 16, 4], strides = [1, 1, 1, 1]} : vector<2x18x18x4xf32> to vector<2x16x16x4xf32>
    %9 = vector.shape_cast %8 : vector<2x16x16x4xf32> to vector<512x4xf32>
    %c1 = arith.constant 1 : index
    %c0_7 = arith.constant 0 : index
    %c0_8 = arith.constant 0 : index
    %10 = vector.load %arg1[%c1, %c0_7, %c0_8] : memref<9x16x4xf32, #tpu.memory_space<vmem>>, vector<1x16x4xf32>
    %11 = vector.shape_cast %10 : vector<1x16x4xf32> to vector<16x4xf32>
    %cst_9 = arith.constant dense<0.000000e+00> : vector<16x512xf32>
    %12 = tpu.matmul %11, %9, %cst_9 {dimension_numbers = #tpu.dot_dimension_numbers<[1], [1], [0], [0], [0, 0, 1, 0], [], []>} : vector<16x4xf32>, vector<512x4xf32>, vector<16x512xf32> -> vector<16x512xf32>
    %13 = arith.addf %7, %12 : vector<16x512xf32>
    %14 = vector.extract_strided_slice %0 {offsets = [0, 0, 2, 0], sizes = [2, 16, 16, 4], strides = [1, 1, 1, 1]} : vector<2x18x18x4xf32> to vector<2x16x16x4xf32>
    %15 = vector.shape_cast %14 : vector<2x16x16x4xf32> to vector<512x4xf32>
    %c2 = arith.constant 2 : index
    %c0_10 = arith.constant 0 : index
    %c0_11 = arith.constant 0 : index
    %16 = vector.load %arg1[%c2, %c0_10, %c0_11] : memref<9x16x4xf32, #tpu.memory_space<vmem>>, vector<1x16x4xf32>
    %17 = vector.shape_cast %16 : vector<1x16x4xf32> to vector<16x4xf32>
    %cst_12 = arith.constant dense<0.000000e+00> : vector<16x512xf32>
    %18 = tpu.matmul %17, %15, %cst_12 {dimension_numbers = #tpu.dot_dimension_numbers<[1], [1], [0], [0], [0, 0, 1, 0], [], []>} : vector<16x4xf32>, vector<512x4xf32>, vector<16x512xf32> -> vector<16x512xf32>
    %19 = arith.addf %13, %18 : vector<16x512xf32>
    %20 = vector.extract_strided_slice %0 {offsets = [0, 1, 0, 0], sizes = [2, 16, 16, 4], strides = [1, 1, 1, 1]} : vector<2x18x18x4xf32> to vector<2x16x16x4xf32>
    %21 = vector.shape_cast %20 : vector<2x16x16x4xf32> to vector<512x4xf32>
    %c3 = arith.constant 3 : index
    %c0_13 = arith.constant 0 : index
    %c0_14 = arith.constant 0 : index
    %22 = vector.load %arg1[%c3, %c0_13, %c0_14] : memref<9x16x4xf32, #tpu.memory_space<vmem>>, vector<1x16x4xf32>
    %23 = vector.shape_cast %22 : vector<1x16x4xf32> to vector<16x4xf32>
    %cst_15 = arith.constant dense<0.000000e+00> : vector<16x512xf32>
    %24 = tpu.matmul %23, %21, %cst_15 {dimension_numbers = #tpu.dot_dimension_numbers<[1], [1], [0], [0], [0, 0, 1, 0], [], []>} : vector<16x4xf32>, vector<512x4xf32>, vector<16x512xf32> -> vector<16x512xf32>
    %25 = arith.addf %19, %24 : vector<16x512xf32>
    %26 = vector.extract_strided_slice %0 {offsets = [0, 1, 1, 0], sizes = [2, 16, 16, 4], strides = [1, 1, 1, 1]} : vector<2x18x18x4xf32> to vector<2x16x16x4xf32>
    %27 = vector.shape_cast %26 : vector<2x16x16x4xf32> to vector<512x4xf32>
    %c4 = arith.constant 4 : index
    %c0_16 = arith.constant 0 : index
    %c0_17 = arith.constant 0 : index
    %28 = vector.load %arg1[%c4, %c0_16, %c0_17] : memref<9x16x4xf32, #tpu.memory_space<vmem>>, vector<1x16x4xf32>
    %29 = vector.shape_cast %28 : vector<1x16x4xf32> to vector<16x4xf32>
    %cst_18 = arith.constant dense<0.000000e+00> : vector<16x512xf32>
    %30 = tpu.matmul %29, %27, %cst_18 {dimension_numbers = #tpu.dot_dimension_numbers<[1], [1], [0], [0], [0, 0, 1, 0], [], []>} : vector<16x4xf32>, vector<512x4xf32>, vector<16x512xf32> -> vector<16x512xf32>
    %31 = arith.addf %25, %30 : vector<16x512xf32>
    %32 = vector.extract_strided_slice %0 {offsets = [0, 1, 2, 0], sizes = [2, 16, 16, 4], strides = [1, 1, 1, 1]} : vector<2x18x18x4xf32> to vector<2x16x16x4xf32>
    %33 = vector.shape_cast %32 : vector<2x16x16x4xf32> to vector<512x4xf32>
    %c5 = arith.constant 5 : index
    %c0_19 = arith.constant 0 : index
    %c0_20 = arith.constant 0 : index
    %34 = vector.load %arg1[%c5, %c0_19, %c0_20] : memref<9x16x4xf32, #tpu.memory_space<vmem>>, vector<1x16x4xf32>
    %35 = vector.shape_cast %34 : vector<1x16x4xf32> to vector<16x4xf32>
    %cst_21 = arith.constant dense<0.000000e+00> : vector<16x512xf32>
    %36 = tpu.matmul %35, %33, %cst_21 {dimension_numbers = #tpu.dot_dimension_numbers<[1], [1], [0], [0], [0, 0, 1, 0], [], []>} : vector<16x4xf32>, vector<512x4xf32>, vector<16x512xf32> -> vector<16x512xf32>
    %37 = arith.addf %31, %36 : vector<16x512xf32>
    %38 = vector.extract_strided_slice %0 {offsets = [0, 2, 0, 0], sizes = [2, 16, 16, 4], strides = [1, 1, 1, 1]} : vector<2x18x18x4xf32> to vector<2x16x16x4xf32>
    %39 = vector.shape_cast %38 : vector<2x16x16x4xf32> to vector<512x4xf32>
    %c6 = arith.constant 6 : index
    %c0_22 = arith.constant 0 : index
    %c0_23 = arith.constant 0 : index
    %40 = vector.load %arg1[%c6, %c0_22, %c0_23] : memref<9x16x4xf32, #tpu.memory_space<vmem>>, vector<1x16x4xf32>
    %41 = vector.shape_cast %40 : vector<1x16x4xf32> to vector<16x4xf32>
    %cst_24 = arith.constant dense<0.000000e+00> : vector<16x512xf32>
    %42 = tpu.matmul %41, %39, %cst_24 {dimension_numbers = #tpu.dot_dimension_numbers<[1], [1], [0], [0], [0, 0, 1, 0], [], []>} : vector<16x4xf32>, vector<512x4xf32>, vector<16x512xf32> -> vector<16x512xf32>
    %43 = arith.addf %37, %42 : vector<16x512xf32>
    %44 = vector.extract_strided_slice %0 {offsets = [0, 2, 1, 0], sizes = [2, 16, 16, 4], strides = [1, 1, 1, 1]} : vector<2x18x18x4xf32> to vector<2x16x16x4xf32>
    %45 = vector.shape_cast %44 : vector<2x16x16x4xf32> to vector<512x4xf32>
    %c7 = arith.constant 7 : index
    %c0_25 = arith.constant 0 : index
    %c0_26 = arith.constant 0 : index
    %46 = vector.load %arg1[%c7, %c0_25, %c0_26] : memref<9x16x4xf32, #tpu.memory_space<vmem>>, vector<1x16x4xf32>
    %47 = vector.shape_cast %46 : vector<1x16x4xf32> to vector<16x4xf32>
    %cst_27 = arith.constant dense<0.000000e+00> : vector<16x512xf32>
    %48 = tpu.matmul %47, %45, %cst_27 {dimension_numbers = #tpu.dot_dimension_numbers<[1], [1], [0], [0], [0, 0, 1, 0], [], []>} : vector<16x4xf32>, vector<512x4xf32>, vector<16x512xf32> -> vector<16x512xf32>
    %49 = arith.addf %43, %48 : vector<16x512xf32>
    %50 = vector.extract_strided_slice %0 {offsets = [0, 2, 2, 0], sizes = [2, 16, 16, 4], strides = [1, 1, 1, 1]} : vector<2x18x18x4xf32> to vector<2x16x16x4xf32>
    %51 = vector.shape_cast %50 : vector<2x16x16x4xf32> to vector<512x4xf32>
    %c8 = arith.constant 8 : index
    %c0_28 = arith.constant 0 : index
    %c0_29 = arith.constant 0 : index
    %52 = vector.load %arg1[%c8, %c0_28, %c0_29] : memref<9x16x4xf32, #tpu.memory_space<vmem>>, vector<1x16x4xf32>
    %53 = vector.shape_cast %52 : vector<1x16x4xf32> to vector<16x4xf32>
    %cst_30 = arith.constant dense<0.000000e+00> : vector<16x512xf32>
    %54 = tpu.matmul %53, %51, %cst_30 {dimension_numbers = #tpu.dot_dimension_numbers<[1], [1], [0], [0], [0, 0, 1, 0], [], []>} : vector<16x4xf32>, vector<512x4xf32>, vector<16x512xf32> -> vector<16x512xf32>
    %55 = arith.addf %49, %54 : vector<16x512xf32>
    %cst_31 = arith.constant dense<0.000000e+00> : vector<16xf32>
    %56 = vector.multi_reduction <add>, %55, %cst_31 [1] : vector<16x512xf32> to vector<16xf32>
    %57 = vector.shape_cast %56 : vector<16xf32> to vector<16x1xf32>
    %cst_32 = arith.constant 5.120000e+02 : f32
    %58 = vector.broadcast %cst_32 : f32 to vector<16x1xf32>
    %59 = arith.divf %57, %58 : vector<16x1xf32>
    %60 = vector.broadcast %59 : vector<16x1xf32> to vector<16x512xf32>
    %61 = arith.subf %55, %60 : vector<16x512xf32>
    %62 = arith.mulf %61, %61 : vector<16x512xf32>
    %cst_33 = arith.constant dense<0.000000e+00> : vector<16xf32>
    %63 = vector.multi_reduction <add>, %62, %cst_33 [1] : vector<16x512xf32> to vector<16xf32>
    %64 = vector.shape_cast %63 : vector<16xf32> to vector<16x1xf32>
    %cst_34 = arith.constant 5.120000e+02 : f32
    %65 = vector.broadcast %cst_34 : f32 to vector<16x1xf32>
    %66 = arith.divf %64, %65 : vector<16x1xf32>
    %67 = vector.broadcast %59 : vector<16x1xf32> to vector<16x512xf32>
    %68 = arith.subf %55, %67 : vector<16x512xf32>
    %cst_35 = arith.constant 9.99999974E-6 : f32
    %69 = vector.broadcast %cst_35 : f32 to vector<16x1xf32>
    %70 = arith.addf %66, %69 : vector<16x1xf32>
    %71 = math.rsqrt %70 : vector<16x1xf32>
    %72 = vector.broadcast %71 : vector<16x1xf32> to vector<16x512xf32>
    %73 = arith.mulf %68, %72 : vector<16x512xf32>
    %cst_36 = arith.constant 0.000000e+00 : f32
    %74 = vector.broadcast %cst_36 : f32 to vector<16x512xf32>
    %75 = arith.maximumf %73, %74 : vector<16x512xf32>
    %c0_37 = arith.constant 0 : index
    %c0_38 = arith.constant 0 : index
    %76 = vector.load %arg2[%c0_37, %c0_38] : memref<16x512xf32, #tpu.memory_space<vmem>>, vector<16x512xf32>
    tpu.vector_store %arg2[%c0_37, %c0_38], %75 {strides = array<i32>} : memref<16x512xf32, #tpu.memory_space<vmem>>, vector<16x512xf32>,
    return
  }
}

</mosaic_0001>

<llo_original>
// kernel: conv_block.1
$region0: #{conv_block.1}
  #allocation0 [shape = 'u32[]', space=smem, size = 0x4, offset = 0x4, fixed_abs, tag = 'smem constant byte address 0x4 - core index']
  #allocation1 [shape = 'u32[144,128]{1,0:T(1,128)}', space=vmem, size = 0x12000, scoped, tag = 'internal scratch']
  %s0 = inlined_call_operand.vmem [shape: f32[2,18,18,4], index: 0, kind: input, shape index: {}]
  %s1 = inlined_call_operand.vmem [shape: f32[9,16,4], index: 1, kind: input, shape index: {}]
  %s2 = inlined_call_operand.vmem [shape: f32[16,512], index: 2, kind: output, shape index: {}]
  %s3 = sld [smem:[#allocation0]]
  $region18: #{conv_block.1} parent=0
    _
  %s5 = ssub.s32 1, %s3
  %s6 = scalar_select 0, %s5, %s3
  // Predicated region
  $region2: #{conv_block.1} parent=0 // pred_check
    _
  $region3: #{conv_block.1} parent=0 // pred_check_branch
    %8 = sbr.rel (0) target = $region5
  $region4: #{conv_block.1} parent=0 // pred_region
    _
  $region5: #{conv_block.1} parent=0 // pred_fallthru
    _
  // Predicated region
  $region6: #{conv_block.1} parent=0 // pred_check
    _
  $region7: #{conv_block.1} parent=0 // pred_check_branch
    %10 = sbr.rel (0) target = $region9
  $region8: #{conv_block.1} parent=0 // pred_region
    _
  $region9: #{conv_block.1} parent=0 // pred_fallthru
    _
  %v11 = vld [vmem:[%s0] sm:$0xff]
  %v12 = vld [vmem:[%s0 + $0x8] sm:$0xff]
  %v13 = vld [vmem:[%s0 + $0x10] sm:$0x3]
  %v14 = vld [vmem:[%s0 + $0x18] sm:$0xff]
  %v15 = vld [vmem:[%s0 + $0x20] sm:$0xff]
  %v16 = vld [vmem:[%s0 + $0x28] sm:$0x3]
  %v17 = vld [vmem:[%s0 + $0x30] sm:$0xff]
  %v18 = vld [vmem:[%s0 + $0x38] sm:$0xff]
  %v19 = vld [vmem:[%s0 + $0x40] sm:$0x3]
  %v20 = vld [vmem:[%s0 + $0x48] sm:$0xff]
  %v21 = vld [vmem:[%s0 + $0x50] sm:$0xff]
  %v22 = vld [vmem:[%s0 + $0x58] sm:$0x3]
  %v23 = vld [vmem:[%s0 + $0x60] sm:$0xff]
  %v24 = vld [vmem:[%s0 + $0x68] sm:$0xff]
  %v25 = vld [vmem:[%s0 + $0x70] sm:$0x3]
  %v26 = vld [vmem:[%s0 + $0x78] sm:$0xff]
  %v27 = vld [vmem:[%s0 + $0x80] sm:$0xff]
  %v28 = vld [vmem:[%s0 + $0x88] sm:$0x3]
  %v29 = vld [vmem:[%s0 + $0x90] sm:$0xff]
  %v30 = vld [vmem:[%s0 + $0x98] sm:$0xff]
  %v31 = vld [vmem:[%s0 + $0xa0] sm:$0x3]
  %v32 = vld [vmem:[%s0 + $0xa8] sm:$0xff]
  %v33 = vld [vmem:[%s0 + $0xb0] sm:$0xff]
  %v34 = vld [vmem:[%s0 + $0xb8] sm:$0x3]
  %v35 = vld [vmem:[%s0 + $0xc0] sm:$0xff]
  %v36 = vld [vmem:[%s0 + $0xc8] sm:$0xff]
  %v37 = vld [vmem:[%s0 + $0xd0] sm:$0x3]
  %v38 = vld [vmem:[%s0 + $0xd8] sm:$0xff]
  %v39 = vld [vmem:[%s0 + $0xe0] sm:$0xff]
  %v40 = vld [vmem:[%s0 + $0xe8] sm:$0x3]
  %v41 = vld [vmem:[%s0 + $0xf0] sm:$0xff]
  %v42 = vld [vmem:[%s0 + $0xf8] sm:$0xff]
  %v43 = vld [vmem:[%s0 + $0x100] sm:$0x3]
  %v44 = vld [vmem:[%s0 + $0x108] sm:$0xff]
  %v45 = vld [vmem:[%s0 + $0x110] sm:$0xff]
  %v46 = vld [vmem:[%s0 + $0x118] sm:$0x3]
  %v47 = vld [vmem:[%s0 + $0x120] sm:$0xff]
  %v48 = vld [vmem:[%s0 + $0x128] sm:$0xff]
  %v49 = vld [vmem:[%s0 + $0x130] sm:$0x3]
  %v50 = vld [vmem:[%s0 + $0x138] sm:$0xff]
  %v51 = vld [vmem:[%s0 + $0x140] sm:$0xff]
  %v52 = vld [vmem:[%s0 + $0x148] sm:$0x3]
  %v53 = vld [vmem:[%s0 + $0x150] sm:$0xff]
  %v54 = vld [vmem:[%s0 + $0x158] sm:$0xff]
  %v55 = vld [vmem:[%s0 + $0x160] sm:$0x3]
  %v56 = vld [vmem:[%s0 + $0x168] sm:$0xff]
  %v57 = vld [vmem:[%s0 + $0x170] sm:$0xff]
  %v58 = vld [vmem:[%s0 + $0x178] sm:$0x3]
  %v59 = vld [vmem:[%s0 + $0x180] sm:$0xff]
  %v60 = vld [vmem:[%s0 + $0x188] sm:$0xff]
  %v61 = vld [vmem:[%s0 + $0x190] sm:$0x3]
  %v62 = vld [vmem:[%s0 + $0x198] sm:$0xff]
  %v63 = vld [vmem:[%s0 + $0x1a0] sm:$0xff]
  %v64 = vld [vmem:[%s0 + $0x1a8] sm:$0x3]
  %v65 = vld [vmem:[%s0 + $0x1b0] sm:$0xff]
  %v66 = vld [vmem:[%s0 + $0x1b8] sm:$0xff]
  %v67 = vld [vmem:[%s0 + $0x1c0] sm:$0x3]
  %v68 = vld [vmem:[%s0 + $0x1c8] sm:$0xff]
  %v69 = vld [vmem:[%s0 + $0x1d0] sm:$0xff]
  %v70 = vld [vmem:[%s0 + $0x1d8] sm:$0x3]
  %v71 = vld [vmem:[%s0 + $0x1e0] sm:$0xff]
  %v72 = vld [vmem:[%s0 + $0x1e8] sm:$0xff]
  %v73 = vld [vmem:[%s0 + $0x1f0] sm:$0x3]
  %v74 = vld [vmem:[%s0 + $0x1f8] sm:$0xff]
  %v75 = vld [vmem:[%s0 + $0x200] sm:$0xff]
  %v76 = vld [vmem:[%s0 + $0x208] sm:$0x3]
  %v77 = vld [vmem:[%s0 + $0x210] sm:$0xff]
  %v78 = vld [vmem:[%s0 + $0x218] sm:$0xff]
  %v79 = vld [vmem:[%s0 + $0x220] sm:$0x3]
  %v80 = vld [vmem:[%s0 + $0x228] sm:$0xff]
  %v81 = vld [vmem:[%s0 + $0x230] sm:$0xff]
  %v82 = vld [vmem:[%s0 + $0x238] sm:$0x3]
  %v83 = vld [vmem:[%s0 + $0x240] sm:$0xff]
  %v84 = vld [vmem:[%s0 + $0x248] sm:$0xff]
  %v85 = vld [vmem:[%s0 + $0x250] sm:$0x3]
  %v86 = vld [vmem:[%s0 + $0x258] sm:$0xff]
  %v87 = vld [vmem:[%s0 + $0x260] sm:$0xff]
  %v88 = vld [vmem:[%s0 + $0x268] sm:$0x3]
  %v89 = vld [vmem:[%s0 + $0x270] sm:$0xff]
  %v90 = vld [vmem:[%s0 + $0x278] sm:$0xff]
  %v91 = vld [vmem:[%s0 + $0x280] sm:$0x3]
  %v92 = vld [vmem:[%s0 + $0x288] sm:$0xff]
  %v93 = vld [vmem:[%s0 + $0x290] sm:$0xff]
  %v94 = vld [vmem:[%s0 + $0x298] sm:$0x3]
  %v95 = vld [vmem:[%s0 + $0x2a0] sm:$0xff]
  %v96 = vld [vmem:[%s0 + $0x2a8] sm:$0xff]
  %v97 = vld [vmem:[%s0 + $0x2b0] sm:$0x3]
  %v98 = vld [vmem:[%s0 + $0x2b8] sm:$0xff]
  %v99 = vld [vmem:[%s0 + $0x2c0] sm:$0xff]
  %v100 = vld [vmem:[%s0 + $0x2c8] sm:$0x3]
  %v101 = vld [vmem:[%s0 + $0x2d0] sm:$0xff]
  %v102 = vld [vmem:[%s0 + $0x2d8] sm:$0xff]
  %v103 = vld [vmem:[%s0 + $0x2e0] sm:$0x3]
  %v104 = vld [vmem:[%s0 + $0x2e8] sm:$0xff]
  %v105 = vld [vmem:[%s0 + $0x2f0] sm:$0xff]
  %v106 = vld [vmem:[%s0 + $0x2f8] sm:$0x3]
  %v107 = vld [vmem:[%s0 + $0x300] sm:$0xff]
  %v108 = vld [vmem:[%s0 + $0x308] sm:$0xff]
  %v109 = vld [vmem:[%s0 + $0x310] sm:$0x3]
  %v110 = vld [vmem:[%s0 + $0x318] sm:$0xff]
  %v111 = vld [vmem:[%s0 + $0x320] sm:$0xff]
  %v112 = vld [vmem:[%s0 + $0x328] sm:$0x3]
  %v113 = vld [vmem:[%s0 + $0x330] sm:$0xff]
  %v114 = vld [vmem:[%s0 + $0x338] sm:$0xff]
  %v115 = vld [vmem:[%s0 + $0x340] sm:$0x3]
  %v116 = vld [vmem:[%s0 + $0x348] sm:$0xff]
  %v117 = vld [vmem:[%s0 + $0x350] sm:$0xff]
  %v118 = vld [vmem:[%s0 + $0x358] sm:$0x3]
  %v119 = vld [vmem:[%s1] sm:$0xff]
  %v120 = vld [vmem:[%s1 + $0x8] sm:$0xff]
  %vm217 = vcmask 1046528
  %v218 = vrot.slane %v11, 1
  %v219 = vrot.slane %v12, 1
  %v220 = vsel %vm217, %v218, %v219
  %v221 = vrot.slane %v13, 1
  %v222 = vsel %vm217, %v219, %v221
  %v223 = vrot.slane %v14, 1
  %v224 = vrot.slane %v15, 1
  %v225 = vsel %vm217, %v223, %v224
  %v226 = vrot.slane %v16, 1
  %v227 = vsel %vm217, %v224, %v226
  %v228 = vrot.slane %v17, 1
  %v229 = vrot.slane %v18, 1
  %v230 = vsel %vm217, %v228, %v229
  %v231 = vrot.slane %v19, 1
  %v232 = vsel %vm217, %v229, %v231
  %v233 = vrot.slane %v20, 1
  %v234 = vrot.slane %v21, 1
  %v235 = vsel %vm217, %v233, %v234
  %v236 = vrot.slane %v22, 1
  %v237 = vsel %vm217, %v234, %v236
  %v238 = vrot.slane %v23, 1
  %v239 = vrot.slane %v24, 1
  %v240 = vsel %vm217, %v238, %v239
  %v241 = vrot.slane %v25, 1
  %v242 = vsel %vm217, %v239, %v241
  %v243 = vrot.slane %v26, 1
  %v244 = vrot.slane %v27, 1
  %v245 = vsel %vm217, %v243, %v244
  %v246 = vrot.slane %v28, 1
  %v247 = vsel %vm217, %v244, %v246
  %v248 = vrot.slane %v29, 1
  %v249 = vrot.slane %v30, 1
  %v250 = vsel %vm217, %v248, %v249
  %v251 = vrot.slane %v31, 1
  %v252 = vsel %vm217, %v249, %v251
  %v253 = vrot.slane %v32, 1
  %v254 = vrot.slane %v33, 1
  %v255 = vsel %vm217, %v253, %v254
  %v256 = vrot.slane %v34, 1
  %v257 = vsel %vm217, %v254, %v256
  %v258 = vrot.slane %v35, 1
  %v259 = vrot.slane %v36, 1
  %v260 = vsel %vm217, %v258, %v259
  %v261 = vrot.slane %v37, 1
  %v262 = vsel %vm217, %v259, %v261
  %v263 = vrot.slane %v38, 1
  %v264 = vrot.slane %v39, 1
  %v265 = vsel %vm217, %v263, %v264
  %v266 = vrot.slane %v40, 1
  %v267 = vsel %vm217, %v264, %v266
  %v268 = vrot.slane %v41, 1
  %v269 = vrot.slane %v42, 1
  %v270 = vsel %vm217, %v268, %v269
  %v271 = vrot.slane %v43, 1
  %v272 = vsel %vm217, %v269, %v271
  %v273 = vrot.slane %v44, 1
  %v274 = vrot.slane %v45, 1
  %v275 = vsel %vm217, %v273, %v274
  %v276 = vrot.slane %v46, 1
  %v277 = vsel %vm217, %v274, %v276
  %v278 = vrot.slane %v47, 1
  %v279 = vrot.slane %v48, 1
  %v280 = vsel %vm217, %v278, %v279
  %v281 = vrot.slane %v49, 1
  %v282 = vsel %vm217, %v279, %v281
  %v283 = vrot.slane %v50, 1
  %v284 = vrot.slane %v51, 1
  %v285 = vsel %vm217, %v283, %v284
  %v286 = vrot.slane %v52, 1
  %v287 = vsel %vm217, %v284, %v286
  %v288 = vrot.slane %v53, 1
  %v289 = vrot.slane %v54, 1
  %v290 = vsel %vm217, %v288, %v289
  %v291 = vrot.slane %v55, 1
  %v292 = vsel %vm217, %v289, %v291
  %v293 = vrot.slane %v56, 1
  %v294 = vrot.slane %v57, 1
  %v295 = vsel %vm217, %v293, %v294
  %v296 = vrot.slane %v58, 1
  %v297 = vsel %vm217, %v294, %v296
  %v298 = vrot.slane %v65, 1
  %v299 = vrot.slane %v66, 1
  %v300 = vsel %vm217, %v298, %v299
  %v301 = vrot.slane %v67, 1
  %v302 = vsel %vm217, %v299, %v301
  %v303 = vrot.slane %v68, 1
  %v304 = vrot.slane %v69, 1
  %v305 = vsel %vm217, %v303, %v304
  %v306 = vrot.slane %v70, 1
  %v307 = vsel %vm217, %v304, %v306
  %v308 = vrot.slane %v71, 1
  %v309 = vrot.slane %v72, 1
  %v310 = vsel %vm217, %v308, %v309
  %v311 = vrot.slane %v73, 1
  %v312 = vsel %vm217, %v309, %v311
  %v313 = vrot.slane %v74, 1
  %v314 = vrot.slane %v75, 1
  %v315 = vsel %vm217, %v313, %v314
  %v316 = vrot.slane %v76, 1
  %v317 = vsel %vm217, %v314, %v316
  %v318 = vrot.slane %v77, 1
  %v319 = vrot.slane %v78, 1
  %v320 = vsel %vm217, %v318, %v319
  %v321 = vrot.slane %v79, 1
  %v322 = vsel %vm217, %v319, %v321
  %v323 = vrot.slane %v80, 1
  %v324 = vrot.slane %v81, 1
  %v325 = vsel %vm217, %v323, %v324
  %v326 = vrot.slane %v82, 1
  %v327 = vsel %vm217, %v324, %v326
  %v328 = vrot.slane %v83, 1
  %v329 = vrot.slane %v84, 1
  %v330 = vsel %vm217, %v328, %v329
  %v331 = vrot.slane %v85, 1
  %v332 = vsel %vm217, %v329, %v331
  %v333 = vrot.slane %v86, 1
  %v334 = vrot.slane %v87, 1
  %v335 = vsel %vm217, %v333, %v334
  %v336 = vrot.slane %v88, 1
  %v337 = vsel %vm217, %v334, %v336
  %v338 = vrot.slane %v89, 1
  %v339 = vrot.slane %v90, 1
  %v340 = vsel %vm217, %v338, %v339
  %v341 = vrot.slane %v91, 1
  %v342 = vsel %vm217, %v339, %v341
  %v343 = vrot.slane %v92, 1
  %v344 = vrot.slane %v93, 1
  %v345 = vsel %vm217, %v343, %v344
  %v346 = vrot.slane %v94, 1
  %v347 = vsel %vm217, %v344, %v346
  %v348 = vrot.slane %v95, 1
  %v349 = vrot.slane %v96, 1
  %v350 = vsel %vm217, %v348, %v349
  %v351 = vrot.slane %v97, 1
  %v352 = vsel %vm217, %v349, %v351
  %v353 = vrot.slane %v98, 1
  %v354 = vrot.slane %v99, 1
  %v355 = vsel %vm217, %v353, %v354
  %v356 = vrot.slane %v100, 1
  %v357 = vsel %vm217, %v354, %v356
  %v358 = vrot.slane %v101, 1
  %v359 = vrot.slane %v102, 1
  %v360 = vsel %vm217, %v358, %v359
  %v361 = vrot.slane %v103, 1
  %v362 = vsel %vm217, %v359, %v361
  %v363 = vrot.slane %v104, 1
  %v364 = vrot.slane %v105, 1
  %v365 = vsel %vm217, %v363, %v364
  %v366 = vrot.slane %v106, 1
  %v367 = vsel %vm217, %v364, %v366
  %v368 = vrot.slane %v107, 1
  %v369 = vrot.slane %v108, 1
  %v370 = vsel %vm217, %v368, %v369
  %v371 = vrot.slane %v109, 1
  %v372 = vsel %vm217, %v369, %v371
  %v373 = vrot.slane %v110, 1
  %v374 = vrot.slane %v111, 1
  %v375 = vsel %vm217, %v373, %v374
  %v376 = vrot.slane %v112, 1
  %v377 = vsel %vm217, %v374, %v376
  %s378 = scalar_lea.vmem %s1, 16
  %v379 = vld [vmem:[%s378] sm:$0xff]
  %v380 = vld [vmem:[%s378 + $0x8] sm:$0xff]
  %vm381 = vcmask 31744
  %v383 = vsel %vm381, %v379, 0
  %v386 = vsel %vm381, %v380, 0
  %v388 = vsel %vm381, %v220, 0
  %v390 = vsel %vm381, %v222, 0
  %v392 = vsel %vm381, %v225, 0
  %v394 = vsel %vm381, %v227, 0
  %v396 = vsel %vm381, %v230, 0
  %v398 = vsel %vm381, %v232, 0
  %v400 = vsel %vm381, %v235, 0
  %v402 = vsel %vm381, %v237, 0
  %v404 = vsel %vm381, %v240, 0
  %v406 = vsel %vm381, %v242, 0
  %v408 = vsel %vm381, %v245, 0
  %v410 = vsel %vm381, %v247, 0
  %v412 = vsel %vm381, %v250, 0
  %v414 = vsel %vm381, %v252, 0
  %v416 = vsel %vm381, %v255, 0
  %v418 = vsel %vm381, %v257, 0
  %v420 = vsel %vm381, %v260, 0
  %v422 = vsel %vm381, %v262, 0
  %v424 = vsel %vm381, %v265, 0
  %v426 = vsel %vm381, %v267, 0
  %v428 = vsel %vm381, %v270, 0
  %v430 = vsel %vm381, %v272, 0
  %v432 = vsel %vm381, %v275, 0
  %v434 = vsel %vm381, %v277, 0
  %v436 = vsel %vm381, %v280, 0
  %v438 = vsel %vm381, %v282, 0
  %v440 = vsel %vm381, %v285, 0
  %v442 = vsel %vm381, %v287, 0
  %v444 = vsel %vm381, %v290, 0
  %v446 = vsel %vm381, %v292, 0
  %v448 = vsel %vm381, %v295, 0
  %v450 = vsel %vm381, %v297, 0
  %v452 = vsel %vm381, %v300, 0
  %v454 = vsel %vm381, %v302, 0
  %v456 = vsel %vm381, %v305, 0
  %v458 = vsel %vm381, %v307, 0
  %v460 = vsel %vm381, %v310, 0
  %v462 = vsel %vm381, %v312, 0
  %v464 = vsel %vm381, %v315, 0
  %v466 = vsel %vm381, %v317, 0
  %v468 = vsel %vm381, %v320, 0
  %v470 = vsel %vm381, %v322, 0
  %v472 = vsel %vm381, %v325, 0
  %v474 = vsel %vm381, %v327, 0
  %v476 = vsel %vm381, %v330, 0
  %v478 = vsel %vm381, %v332, 0
  %v480 = vsel %vm381, %v335, 0
  %v482 = vsel %vm381, %v337, 0
  %v484 = vsel %vm381, %v340, 0
  %v486 = vsel %vm381, %v342, 0
  %v488 = vsel %vm381, %v345, 0
  %v490 = vsel %vm381, %v347, 0
  %v492 = vsel %vm381, %v350, 0
  %v494 = vsel %vm381, %v352, 0
  %v496 = vsel %vm381, %v355, 0
  %v498 = vsel %vm381, %v357, 0
  %v500 = vsel %vm381, %v360, 0
  %v502 = vsel %vm381, %v362, 0
  %v504 = vsel %vm381, %v365, 0
  %v506 = vsel %vm381, %v367, 0
  %v508 = vsel %vm381, %v370, 0
  %v510 = vsel %vm381, %v372, 0
  %v512 = vsel %vm381, %v375, 0
  %v514 = vsel %vm381, %v377, 0
  %516 = vmatprep.subr.mxu0 0.0
  %517 = vmatpush1.xpose.msra.mxu0 %v388
  %518 = vmatprep.subr.mxu0 0.0
  %519 = vmatpush1.xpose.msra.mxu0 %v390
  %520 = vmatprep.subr.mxu0 0.0
  %521 = vmatpush1.xpose.msra.mxu0 %v392
  %522 = vmatprep.subr.mxu0 0.0
  %523 = vmatpush1.xpose.msra.mxu0 %v394
  %524 = vmatprep.subr.mxu0 0.0
  %525 = vmatpush1.xpose.msra.mxu0 %v396
  %526 = vmatprep.subr.mxu0 0.0
  %527 = vmatpush1.xpose.msra.mxu0 %v398
  %528 = vmatprep.subr.mxu0 0.0
  %529 = vmatpush1.xpose.msra.mxu0 %v400
  %530 = vmatprep.subr.mxu0 0.0
  %531 = vmatpush1.xpose.msra.mxu0 %v402
  %532 = vmatprep.subr.mxu0 0.0
  %533 = vmatpush1.xpose.msra.mxu0 %v404
  %534 = vmatprep.subr.mxu0 0.0
  %535 = vmatpush1.xpose.msra.mxu0 %v406
  %536 = vmatprep.subr.mxu0 0.0
  %537 = vmatpush1.xpose.msra.mxu0 %v408
  %538 = vmatprep.subr.mxu0 0.0
  %539 = vmatpush1.xpose.msra.mxu0 %v410
  %540 = vmatprep.subr.mxu0 0.0
  %541 = vmatpush1.xpose.msra.mxu0 %v412
  %542 = vmatprep.subr.mxu0 0.0
  %543 = vmatpush1.xpose.msra.mxu0 %v414
  %544 = vmatprep.subr.mxu0 0.0
  %545 = vmatpush1.xpose.msra.mxu0 %v416
  %546 = vmatprep.subr.mxu0 0.0
  %547 = vmatpush1.xpose.msra.mxu0 %v418
  %548 = vmatprep.subr.mxu0 0.0
  %549 = vmatpush1.xpose.msra.mxu0 %v420
  %550 = vmatprep.subr.mxu0 0.0
  %551 = vmatpush1.xpose.msra.mxu0 %v422
  %552 = vmatprep.subr.mxu0 0.0
  %553 = vmatpush1.xpose.msra.mxu0 %v424
  %554 = vmatprep.subr.mxu0 0.0
  %555 = vmatpush1.xpose.msra.mxu0 %v426
  %556 = vmatprep.subr.mxu0 0.0
  %557 = vmatpush1.xpose.msra.mxu0 %v428
  %558 = vmatprep.subr.mxu0 0.0
  %559 = vmatpush1.xpose.msra.mxu0 %v430
  %560 = vmatprep.subr.mxu0 0.0
  %561 = vmatpush1.xpose.msra.mxu0 %v432
  %562 = vmatprep.subr.mxu0 0.0
  %563 = vmatpush1.xpose.msra.mxu0 %v434
  %564 = vmatprep.subr.mxu0 0.0
  %565 = vmatpush1.xpose.msra.mxu0 %v436
  %566 = vmatprep.subr.mxu0 0.0
  %567 = vmatpush1.xpose.msra.mxu0 %v438
  %568 = vmatprep.subr.mxu0 0.0
  %569 = vmatpush1.xpose.msra.mxu0 %v440
  %570 = vmatprep.subr.mxu0 0.0
  %571 = vmatpush1.xpose.msra.mxu0 %v442
  %572 = vmatprep.subr.mxu0 0.0
  %573 = vmatpush1.xpose.msra.mxu0 %v444
  %574 = vmatprep.subr.mxu0 0.0
  %575 = vmatpush1.xpose.msra.mxu0 %v446
  %576 = vmatprep.subr.mxu0 0.0
  %577 = vmatpush1.xpose.msra.mxu0 %v448
  %578 = vmatprep.subr.mxu0 0.0
  %579 = vmatpush1.xpose.msra.mxu0 %v450
  %580 = vmatprep.mubr.f32.mxu0 0.0
  %581 = vmatmul.mubr.f32.gmra.mrb[0].mxu0 %v383
  %v582 = vpop.f32.mrb[0].mxu0
  %v583 = vadd.f32 0.0, %v582
  %v584 = vpop.f32.mrb[0].mxu0
  %v585 = vadd.f32 0.0, %v584
  %586 = vmatprep.mubr.f32.mxu0 0.0
  %587 = vmatmul.mubr.f32.gmra.mrb[0].mxu0 %v386
  %v588 = vpop.f32.mrb[0].mxu0
  %v589 = vadd.f32 0.0, %v588
  %v590 = vpop.f32.mrb[0].mxu0
  %v591 = vadd.f32 0.0, %v590
  %592 = vdwg.mxu0
  %593 = vmatprep.subr.mxu0 0.0
  %594 = vmatpush1.xpose.msra.mxu0 %v452
  %595 = vmatprep.subr.mxu0 0.0
  %596 = vmatpush1.xpose.msra.mxu0 %v454
  %597 = vmatprep.subr.mxu0 0.0
  %598 = vmatpush1.xpose.msra.mxu0 %v456
  %599 = vmatprep.subr.mxu0 0.0
  %600 = vmatpush1.xpose.msra.mxu0 %v458
  %601 = vmatprep.subr.mxu0 0.0
  %602 = vmatpush1.xpose.msra.mxu0 %v460
  %603 = vmatprep.subr.mxu0 0.0
  %604 = vmatpush1.xpose.msra.mxu0 %v462
  %605 = vmatprep.subr.mxu0 0.0
  %606 = vmatpush1.xpose.msra.mxu0 %v464
  %607 = vmatprep.subr.mxu0 0.0
  %608 = vmatpush1.xpose.msra.mxu0 %v466
  %609 = vmatprep.subr.mxu0 0.0
  %610 = vmatpush1.xpose.msra.mxu0 %v468
  %611 = vmatprep.subr.mxu0 0.0
  %612 = vmatpush1.xpose.msra.mxu0 %v470
  %613 = vmatprep.subr.mxu0 0.0
  %614 = vmatpush1.xpose.msra.mxu0 %v472
  %615 = vmatprep.subr.mxu0 0.0
  %616 = vmatpush1.xpose.msra.mxu0 %v474
  %617 = vmatprep.subr.mxu0 0.0
  %618 = vmatpush1.xpose.msra.mxu0 %v476
  %619 = vmatprep.subr.mxu0 0.0
  %620 = vmatpush1.xpose.msra.mxu0 %v478
  %621 = vmatprep.subr.mxu0 0.0
  %622 = vmatpush1.xpose.msra.mxu0 %v480
  %623 = vmatprep.subr.mxu0 0.0
  %624 = vmatpush1.xpose.msra.mxu0 %v482
  %625 = vmatprep.subr.mxu0 0.0
  %626 = vmatpush1.xpose.msra.mxu0 %v484
  %627 = vmatprep.subr.mxu0 0.0
  %628 = vmatpush1.xpose.msra.mxu0 %v486
  %629 = vmatprep.subr.mxu0 0.0
  %630 = vmatpush1.xpose.msra.mxu0 %v488
  %631 = vmatprep.subr.mxu0 0.0
  %632 = vmatpush1.xpose.msra.mxu0 %v490
  %633 = vmatprep.subr.mxu0 0.0
  %634 = vmatpush1.xpose.msra.mxu0 %v492
  %635 = vmatprep.subr.mxu0 0.0
  %636 = vmatpush1.xpose.msra.mxu0 %v494
  %637 = vmatprep.subr.mxu0 0.0
  %638 = vmatpush1.xpose.msra.mxu0 %v496
  %639 = vmatprep.subr.mxu0 0.0
  %640 = vmatpush1.xpose.msra.mxu0 %v498
  %641 = vmatprep.subr.mxu0 0.0
  %642 = vmatpush1.xpose.msra.mxu0 %v500
  %643 = vmatprep.subr.mxu0 0.0
  %644 = vmatpush1.xpose.msra.mxu0 %v502
  %645 = vmatprep.subr.mxu0 0.0
  %646 = vmatpush1.xpose.msra.mxu0 %v504
  %647 = vmatprep.subr.mxu0 0.0
  %648 = vmatpush1.xpose.msra.mxu0 %v506
  %649 = vmatprep.subr.mxu0 0.0
  %650 = vmatpush1.xpose.msra.mxu0 %v508
  %651 = vmatprep.subr.mxu0 0.0
  %652 = vmatpush1.xpose.msra.mxu0 %v510
  %653 = vmatprep.subr.mxu0 0.0
  %654 = vmatpush1.xpose.msra.mxu0 %v512
  %655 = vmatprep.subr.mxu0 0.0
  %656 = vmatpush1.xpose.msra.mxu0 %v514
  %657 = vmatprep.mubr.f32.mxu0 0.0
  %658 = vmatmul.mubr.f32.gmra.mrb[0].mxu0 %v383
  %v659 = vpop.f32.mrb[0].mxu0
  %v660 = vadd.f32 0.0, %v659
  %v661 = vpop.f32.mrb[0].mxu0
  %v662 = vadd.f32 0.0, %v661
  %663 = vmatprep.mubr.f32.mxu0 0.0
  %664 = vmatmul.mubr.f32.gmra.mrb[0].mxu0 %v386
  %v665 = vpop.f32.mrb[0].mxu0
  %v666 = vadd.f32 0.0, %v665
  %v667 = vpop.f32.mrb[0].mxu0
  %v668 = vadd.f32 0.0, %v667
  %669 = vdwg.mxu0
  %v671 = vsel %vm381, %v119, 0
  %v674 = vsel %vm381, %v120, 0
  %v676 = vsel %vm381, %v11, 0
  %v678 = vsel %vm381, %v12, 0
  %v680 = vsel %vm381, %v14, 0
  %v682 = vsel %vm381, %v15, 0
  %v684 = vsel %vm381, %v17, 0
  %v686 = vsel %vm381, %v18, 0
  %v688 = vsel %vm381, %v20, 0
  %v690 = vsel %vm381, %v21, 0
  %v692 = vsel %vm381, %v23, 0
  %v694 = vsel %vm381, %v24, 0
  %v696 = vsel %vm381, %v26, 0
  %v698 = vsel %vm381, %v27, 0
  %v700 = vsel %vm381, %v29, 0
  %v702 = vsel %vm381, %v30, 0
  %v704 = vsel %vm381, %v32, 0
  %v706 = vsel %vm381, %v33, 0
  %v708 = vsel %vm381, %v35, 0
  %v710 = vsel %vm381, %v36, 0
  %v712 = vsel %vm381, %v38, 0
  %v714 = vsel %vm381, %v39, 0
  %v716 = vsel %vm381, %v41, 0
  %v718 = vsel %vm381, %v42, 0
  %v720 = vsel %vm381, %v44, 0
  %v722 = vsel %vm381, %v45, 0
  %v724 = vsel %vm381, %v47, 0
  %v726 = vsel %vm381, %v48, 0
  %v728 = vsel %vm381, %v50, 0
  %v730 = vsel %vm381, %v51, 0
  %v732 = vsel %vm381, %v53, 0
  %v734 = vsel %vm381, %v54, 0
  %v736 = vsel %vm381, %v56, 0
  %v738 = vsel %vm381, %v57, 0
  %v740 = vsel %vm381, %v65, 0
  %v742 = vsel %vm381, %v66, 0
  %v744 = vsel %vm381, %v68, 0
  %v746 = vsel %vm381, %v69, 0
  %v748 = vsel %vm381, %v71, 0
  %v750 = vsel %vm381, %v72, 0
  %v752 = vsel %vm381, %v74, 0
  %v754 = vsel %vm381, %v75, 0
  %v756 = vsel %vm381, %v77, 0
  %v758 = vsel %vm381, %v78, 0
  %v760 = vsel %vm381, %v80, 0
  %v762 = vsel %vm381, %v81, 0
  %v764 = vsel %vm381, %v83, 0
  %v766 = vsel %vm381, %v84, 0
  %v768 = vsel %vm381, %v86, 0
  %v770 = vsel %vm381, %v87, 0
  %v772 = vsel %vm381, %v89, 0
  %v774 = vsel %vm381, %v90, 0
  %v776 = vsel %vm381, %v92, 0
  %v778 = vsel %vm381, %v93, 0
  %v780 = vsel %vm381, %v95, 0
  %v782 = vsel %vm381, %v96, 0
  %v784 = vsel %vm381, %v98, 0
  %v786 = vsel %vm381, %v99, 0
  %v788 = vsel %vm381, %v101, 0
  %v790 = vsel %vm381, %v102, 0
  %v792 = vsel %vm381, %v104, 0
  %v794 = vsel %vm381, %v105, 0
  %v796 = vsel %vm381, %v107, 0
  %v798 = vsel %vm381, %v108, 0
  %v800 = vsel %vm381, %v110, 0
  %v802 = vsel %vm381, %v111, 0
  %804 = vmatprep.subr.mxu0 0.0
  %805 = vmatpush1.xpose.msra.mxu0 %v676
  %806 = vmatprep.subr.mxu0 0.0
  %807 = vmatpush1.xpose.msra.mxu0 %v678
  %808 = vmatprep.subr.mxu0 0.0
  %809 = vmatpush1.xpose.msra.mxu0 %v680
  %810 = vmatprep.subr.mxu0 0.0
  %811 = vmatpush1.xpose.msra.mxu0 %v682
  %812 = vmatprep.subr.mxu0 0.0
  %813 = vmatpush1.xpose.msra.mxu0 %v684
  %814 = vmatprep.subr.mxu0 0.0
  %815 = vmatpush1.xpose.msra.mxu0 %v686
  %816 = vmatprep.subr.mxu0 0.0
  %817 = vmatpush1.xpose.msra.mxu0 %v688
  %818 = vmatprep.subr.mxu0 0.0
  %819 = vmatpush1.xpose.msra.mxu0 %v690
  %820 = vmatprep.subr.mxu0 0.0
  %821 = vmatpush1.xpose.msra.mxu0 %v692
  %822 = vmatprep.subr.mxu0 0.0
  %823 = vmatpush1.xpose.msra.mxu0 %v694
  %824 = vmatprep.subr.mxu0 0.0
  %825 = vmatpush1.xpose.msra.mxu0 %v696
  %826 = vmatprep.subr.mxu0 0.0
  %827 = vmatpush1.xpose.msra.mxu0 %v698
  %828 = vmatprep.subr.mxu0 0.0
  %829 = vmatpush1.xpose.msra.mxu0 %v700
  %830 = vmatprep.subr.mxu0 0.0
  %831 = vmatpush1.xpose.msra.mxu0 %v702
  %832 = vmatprep.subr.mxu0 0.0
  %833 = vmatpush1.xpose.msra.mxu0 %v704
  %834 = vmatprep.subr.mxu0 0.0
  %835 = vmatpush1.xpose.msra.mxu0 %v706
  %836 = vmatprep.subr.mxu0 0.0
  %837 = vmatpush1.xpose.msra.mxu0 %v708
  %838 = vmatprep.subr.mxu0 0.0
  %839 = vmatpush1.xpose.msra.mxu0 %v710
  %840 = vmatprep.subr.mxu0 0.0
  %841 = vmatpush1.xpose.msra.mxu0 %v712
  %842 = vmatprep.subr.mxu0 0.0
  %843 = vmatpush1.xpose.msra.mxu0 %v714
  %844 = vmatprep.subr.mxu0 0.0
  %845 = vmatpush1.xpose.msra.mxu0 %v716
  %846 = vmatprep.subr.mxu0 0.0
  %847 = vmatpush1.xpose.msra.mxu0 %v718
  %848 = vmatprep.subr.mxu0 0.0
  %849 = vmatpush1.xpose.msra.mxu0 %v720
  %850 = vmatprep.subr.mxu0 0.0
  %851 = vmatpush1.xpose.msra.mxu0 %v722
  %852 = vmatprep.subr.mxu0 0.0
  %853 = vmatpush1.xpose.msra.mxu0 %v724
  %854 = vmatprep.subr.mxu0 0.0
  %855 = vmatpush1.xpose.msra.mxu0 %v726
  %856 = vmatprep.subr.mxu0 0.0
  %857 = vmatpush1.xpose.msra.mxu0 %v728
  %858 = vmatprep.subr.mxu0 0.0
  %859 = vmatpush1.xpose.msra.mxu0 %v730
  %860 = vmatprep.subr.mxu0 0.0
  %861 = vmatpush1.xpose.msra.mxu0 %v732
  %862 = vmatprep.subr.mxu0 0.0
  %863 = vmatpush1.xpose.msra.mxu0 %v734
  %864 = vmatprep.subr.mxu0 0.0
  %865 = vmatpush1.xpose.msra.mxu0 %v736
  %866 = vmatprep.subr.mxu0 0.0
  %867 = vmatpush1.xpose.msra.mxu0 %v738
  %868 = vmatprep.mubr.f32.mxu0 0.0
  %869 = vmatmul.mubr.f32.gmra.mrb[0].mxu0 %v671
  %v870 = vpop.f32.mrb[0].mxu0
  %v871 = vadd.f32 %v583, %v870
  %v872 = vpop.f32.mrb[0].mxu0
  %v873 = vadd.f32 %v585, %v872
  %874 = vmatprep.mubr.f32.mxu0 0.0
  %875 = vmatmul.mubr.f32.gmra.mrb[0].mxu0 %v674
  %v876 = vpop.f32.mrb[0].mxu0
  %v877 = vadd.f32 %v589, %v876
  %v878 = vpop.f32.mrb[0].mxu0
  %v879 = vadd.f32 %v591, %v878
  %880 = vdwg.mxu0
  %881 = vmatprep.subr.mxu0 0.0
  %882 = vmatpush1.xpose.msra.mxu0 %v740
  %883 = vmatprep.subr.mxu0 0.0
  %884 = vmatpush1.xpose.msra.mxu0 %v742
  %885 = vmatprep.subr.mxu0 0.0
  %886 = vmatpush1.xpose.msra.mxu0 %v744
  %887 = vmatprep.subr.mxu0 0.0
  %888 = vmatpush1.xpose.msra.mxu0 %v746
  %889 = vmatprep.subr.mxu0 0.0
  %890 = vmatpush1.xpose.msra.mxu0 %v748
  %891 = vmatprep.subr.mxu0 0.0
  %892 = vmatpush1.xpose.msra.mxu0 %v750
  %893 = vmatprep.subr.mxu0 0.0
  %894 = vmatpush1.xpose.msra.mxu0 %v752
  %895 = vmatprep.subr.mxu0 0.0
  %896 = vmatpush1.xpose.msra.mxu0 %v754
  %897 = vmatprep.subr.mxu0 0.0
  %898 = vmatpush1.xpose.msra.mxu0 %v756
  %899 = vmatprep.subr.mxu0 0.0
  %900 = vmatpush1.xpose.msra.mxu0 %v758
  %901 = vmatprep.subr.mxu0 0.0
  %902 = vmatpush1.xpose.msra.mxu0 %v760
  %903 = vmatprep.subr.mxu0 0.0
  %904 = vmatpush1.xpose.msra.mxu0 %v762
  %905 = vmatprep.subr.mxu0 0.0
  %906 = vmatpush1.xpose.msra.mxu0 %v764
  %907 = vmatprep.subr.mxu0 0.0
  %908 = vmatpush1.xpose.msra.mxu0 %v766
  %909 = vmatprep.subr.mxu0 0.0
  %910 = vmatpush1.xpose.msra.mxu0 %v768
  %911 = vmatprep.subr.mxu0 0.0
  %912 = vmatpush1.xpose.msra.mxu0 %v770
  %913 = vmatprep.subr.mxu0 0.0
  %914 = vmatpush1.xpose.msra.mxu0 %v772
  %915 = vmatprep.subr.mxu0 0.0
  %916 = vmatpush1.xpose.msra.mxu0 %v774
  %917 = vmatprep.subr.mxu0 0.0
  %918 = vmatpush1.xpose.msra.mxu0 %v776
  %919 = vmatprep.subr.mxu0 0.0
  %920 = vmatpush1.xpose.msra.mxu0 %v778
  %921 = vmatprep.subr.mxu0 0.0
  %922 = vmatpush1.xpose.msra.mxu0 %v780
  %923 = vmatprep.subr.mxu0 0.0
  %924 = vmatpush1.xpose.msra.mxu0 %v782
  %925 = vmatprep.subr.mxu0 0.0
  %926 = vmatpush1.xpose.msra.mxu0 %v784
  %927 = vmatprep.subr.mxu0 0.0
  %928 = vmatpush1.xpose.msra.mxu0 %v786
  %929 = vmatprep.subr.mxu0 0.0
  %930 = vmatpush1.xpose.msra.mxu0 %v788
  %931 = vmatprep.subr.mxu0 0.0
  %932 = vmatpush1.xpose.msra.mxu0 %v790
  %933 = vmatprep.subr.mxu0 0.0
  %934 = vmatpush1.xpose.msra.mxu0 %v792
  %935 = vmatprep.subr.mxu0 0.0
  %936 = vmatpush1.xpose.msra.mxu0 %v794
  %937 = vmatprep.subr.mxu0 0.0
  %938 = vmatpush1.xpose.msra.mxu0 %v796
  %939 = vmatprep.subr.mxu0 0.0
  %940 = vmatpush1.xpose.msra.mxu0 %v798
  %941 = vmatprep.subr.mxu0 0.0
  %942 = vmatpush1.xpose.msra.mxu0 %v800
  %943 = vmatprep.subr.mxu0 0.0
  %944 = vmatpush1.xpose.msra.mxu0 %v802
  %945 = vmatprep.mubr.f32.mxu0 0.0
  %946 = vmatmul.mubr.f32.gmra.mrb[0].mxu0 %v671
  %v947 = vpop.f32.mrb[0].mxu0
  %v948 = vadd.f32 %v660, %v947
  %v949 = vpop.f32.mrb[0].mxu0
  %v950 = vadd.f32 %v662, %v949
  %951 = vmatprep.mubr.f32.mxu0 0.0
  %952 = vmatmul.mubr.f32.gmra.mrb[0].mxu0 %v674
  %v953 = vpop.f32.mrb[0].mxu0
  %v954 = vadd.f32 %v666, %v953
  %v955 = vpop.f32.mrb[0].mxu0
  %v956 = vadd.f32 %v668, %v955
  %957 = vdwg.mxu0
  %vm958 = vcmask 1045504
  %v959 = vrot.slane %v11, 2
  %v960 = vrot.slane %v12, 2
  %v961 = vsel %vm958, %v959, %v960
  %v962 = vrot.slane %v13, 2
  %v963 = vsel %vm958, %v960, %v962
  %v964 = vrot.slane %v14, 2
  %v965 = vrot.slane %v15, 2
  %v966 = vsel %vm958, %v964, %v965
  %v967 = vrot.slane %v16, 2
  %v968 = vsel %vm958, %v965, %v967
  %v969 = vrot.slane %v17, 2
  %v970 = vrot.slane %v18, 2
  %v971 = vsel %vm958, %v969, %v970
  %v972 = vrot.slane %v19, 2
  %v973 = vsel %vm958, %v970, %v972
  %v974 = vrot.slane %v20, 2
  %v975 = vrot.slane %v21, 2
  %v976 = vsel %vm958, %v974, %v975
  %v977 = vrot.slane %v22, 2
  %v978 = vsel %vm958, %v975, %v977
  %v979 = vrot.slane %v23, 2
  %v980 = vrot.slane %v24, 2
  %v981 = vsel %vm958, %v979, %v980
  %v982 = vrot.slane %v25, 2
  %v983 = vsel %vm958, %v980, %v982
  %v984 = vrot.slane %v26, 2
  %v985 = vrot.slane %v27, 2
  %v986 = vsel %vm958, %v984, %v985
  %v987 = vrot.slane %v28, 2
  %v988 = vsel %vm958, %v985, %v987
  %v989 = vrot.slane %v29, 2
  %v990 = vrot.slane %v30, 2
  %v991 = vsel %vm958, %v989, %v990
  %v992 = vrot.slane %v31, 2
  %v993 = vsel %vm958, %v990, %v992
  %v994 = vrot.slane %v32, 2
  %v995 = vrot.slane %v33, 2
  %v996 = vsel %vm958, %v994, %v995
  %v997 = vrot.slane %v34, 2
  %v998 = vsel %vm958, %v995, %v997
  %v999 = vrot.slane %v35, 2
  %v1000 = vrot.slane %v36, 2
  %v1001 = vsel %vm958, %v999, %v1000
  %v1002 = vrot.slane %v37, 2
  %v1003 = vsel %vm958, %v1000, %v1002
  %v1004 = vrot.slane %v38, 2
  %v1005 = vrot.slane %v39, 2
  %v1006 = vsel %vm958, %v1004, %v1005
  %v1007 = vrot.slane %v40, 2
  %v1008 = vsel %vm958, %v1005, %v1007
  %v1009 = vrot.slane %v41, 2
  %v1010 = vrot.slane %v42, 2
  %v1011 = vsel %vm958, %v1009, %v1010
  %v1012 = vrot.slane %v43, 2
  %v1013 = vsel %vm958, %v1010, %v1012
  %v1014 = vrot.slane %v44, 2
  %v1015 = vrot.slane %v45, 2
  %v1016 = vsel %vm958, %v1014, %v1015
  %v1017 = vrot.slane %v46, 2
  %v1018 = vsel %vm958, %v1015, %v1017
  %v1019 = vrot.slane %v47, 2
  %v1020 = vrot.slane %v48, 2
  %v1021 = vsel %vm958, %v1019, %v1020
  %v1022 = vrot.slane %v49, 2
  %v1023 = vsel %vm958, %v1020, %v1022
  %v1024 = vrot.slane %v50, 2
  %v1025 = vrot.slane %v51, 2
  %v1026 = vsel %vm958, %v1024, %v1025
  %v1027 = vrot.slane %v52, 2
  %v1028 = vsel %vm958, %v1025, %v1027
  %v1029 = vrot.slane %v53, 2
  %v1030 = vrot.slane %v54, 2
  %v1031 = vsel %vm958, %v1029, %v1030
  %v1032 = vrot.slane %v55, 2
  %v1033 = vsel %vm958, %v1030, %v1032
  %v1034 = vrot.slane %v56, 2
  %v1035 = vrot.slane %v57, 2
  %v1036 = vsel %vm958, %v1034, %v1035
  %v1037 = vrot.slane %v58, 2
  %v1038 = vsel %vm958, %v1035, %v1037
  %v1039 = vrot.slane %v65, 2
  %v1040 = vrot.slane %v66, 2
  %v1041 = vsel %vm958, %v1039, %v1040
  %v1042 = vrot.slane %v67, 2
  %v1043 = vsel %vm958, %v1040, %v1042
  %v1044 = vrot.slane %v68, 2
  %v1045 = vrot.slane %v69, 2
  %v1046 = vsel %vm958, %v1044, %v1045
  %v1047 = vrot.slane %v70, 2
  %v1048 = vsel %vm958, %v1045, %v1047
  %v1049 = vrot.slane %v71, 2
  %v1050 = vrot.slane %v72, 2
  %v1051 = vsel %vm958, %v1049, %v1050
  %v1052 = vrot.slane %v73, 2
  %v1053 = vsel %vm958, %v1050, %v1052
  %v1054 = vrot.slane %v74, 2
  %v1055 = vrot.slane %v75, 2
  %v1056 = vsel %vm958, %v1054, %v1055
  %v1057 = vrot.slane %v76, 2
  %v1058 = vsel %vm958, %v1055, %v1057
  %v1059 = vrot.slane %v77, 2
  %v1060 = vrot.slane %v78, 2
  %v1061 = vsel %vm958, %v1059, %v1060
  %v1062 = vrot.slane %v79, 2
  %v1063 = vsel %vm958, %v1060, %v1062
  %v1064 = vrot.slane %v80, 2
  %v1065 = vrot.slane %v81, 2
  %v1066 = vsel %vm958, %v1064, %v1065
  %v1067 = vrot.slane %v82, 2
  %v1068 = vsel %vm958, %v1065, %v1067
  %v1069 = vrot.slane %v83, 2
  %v1070 = vrot.slane %v84, 2
  %v1071 = vsel %vm958, %v1069, %v1070
  %v1072 = vrot.slane %v85, 2
  %v1073 = vsel %vm958, %v1070, %v1072
  %v1074 = vrot.slane %v86, 2
  %v1075 = vrot.slane %v87, 2
  %v1076 = vsel %vm958, %v1074, %v1075
  %v1077 = vrot.slane %v88, 2
  %v1078 = vsel %vm958, %v1075, %v1077
  %v1079 = vrot.slane %v89, 2
  %v1080 = vrot.slane %v90, 2
  %v1081 = vsel %vm958, %v1079, %v1080
  %v1082 = vrot.slane %v91, 2
  %v1083 = vsel %vm958, %v1080, %v1082
  %v1084 = vrot.slane %v92, 2
  %v1085 = vrot.slane %v93, 2
  %v1086 = vsel %vm958, %v1084, %v1085
  %v1087 = vrot.slane %v94, 2
  %v1088 = vsel %vm958, %v1085, %v1087
  %v1089 = vrot.slane %v95, 2
  %v1090 = vrot.slane %v96, 2
  %v1091 = vsel %vm958, %v1089, %v1090
  %v1092 = vrot.slane %v97, 2
  %v1093 = vsel %vm958, %v1090, %v1092
  %v1094 = vrot.slane %v98, 2
  %v1095 = vrot.slane %v99, 2
  %v1096 = vsel %vm958, %v1094, %v1095
  %v1097 = vrot.slane %v100, 2
  %v1098 = vsel %vm958, %v1095, %v1097
  %v1099 = vrot.slane %v101, 2
  %v1100 = vrot.slane %v102, 2
  %v1101 = vsel %vm958, %v1099, %v1100
  %v1102 = vrot.slane %v103, 2
  %v1103 = vsel %vm958, %v1100, %v1102
  %v1104 = vrot.slane %v104, 2
  %v1105 = vrot.slane %v105, 2
  %v1106 = vsel %vm958, %v1104, %v1105
  %v1107 = vrot.slane %v106, 2
  %v1108 = vsel %vm958, %v1105, %v1107
  %v1109 = vrot.slane %v107, 2
  %v1110 = vrot.slane %v108, 2
  %v1111 = vsel %vm958, %v1109, %v1110
  %v1112 = vrot.slane %v109, 2
  %v1113 = vsel %vm958, %v1110, %v1112
  %v1114 = vrot.slane %v110, 2
  %v1115 = vrot.slane %v111, 2
  %v1116 = vsel %vm958, %v1114, %v1115
  %v1117 = vrot.slane %v112, 2
  %v1118 = vsel %vm958, %v1115, %v1117
  %s1119 = scalar_lea.vmem %s1, 32
  %v1120 = vld [vmem:[%s1119] sm:$0xff]
  %v1121 = vld [vmem:[%s1119 + $0x8] sm:$0xff]
  %v1123 = vsel %vm381, %v1120, 0
  %v1126 = vsel %vm381, %v1121, 0
  %v1128 = vsel %vm381, %v961, 0
  %v1130 = vsel %vm381, %v963, 0
  %v1132 = vsel %vm381, %v966, 0
  %v1134 = vsel %vm381, %v968, 0
  %v1136 = vsel %vm381, %v971, 0
  %v1138 = vsel %vm381, %v973, 0
  %v1140 = vsel %vm381, %v976, 0
  %v1142 = vsel %vm381, %v978, 0
  %v1144 = vsel %vm381, %v981, 0
  %v1146 = vsel %vm381, %v983, 0
  %v1148 = vsel %vm381, %v986, 0
  %v1150 = vsel %vm381, %v988, 0
  %v1152 = vsel %vm381, %v991, 0
  %v1154 = vsel %vm381, %v993, 0
  %v1156 = vsel %vm381, %v996, 0
  %v1158 = vsel %vm381, %v998, 0
  %v1160 = vsel %vm381, %v1001, 0
  %v1162 = vsel %vm381, %v1003, 0
  %v1164 = vsel %vm381, %v1006, 0
  %v1166 = vsel %vm381, %v1008, 0
  %v1168 = vsel %vm381, %v1011, 0
  %v1170 = vsel %vm381, %v1013, 0
  %v1172 = vsel %vm381, %v1016, 0
  %v1174 = vsel %vm381, %v1018, 0
  %v1176 = vsel %vm381, %v1021, 0
  %v1178 = vsel %vm381, %v1023, 0
  %v1180 = vsel %vm381, %v1026, 0
  %v1182 = vsel %vm381, %v1028, 0
  %v1184 = vsel %vm381, %v1031, 0
  %v1186 = vsel %vm381, %v1033, 0
  %v1188 = vsel %vm381, %v1036, 0
  %v1190 = vsel %vm381, %v1038, 0
  %v1192 = vsel %vm381, %v1041, 0
  %v1194 = vsel %vm381, %v1043, 0
  %v1196 = vsel %vm381, %v1046, 0
  %v1198 = vsel %vm381, %v1048, 0
  %v1200 = vsel %vm381, %v1051, 0
  %v1202 = vsel %vm381, %v1053, 0
  %v1204 = vsel %vm381, %v1056, 0
  %v1206 = vsel %vm381, %v1058, 0
  %v1208 = vsel %vm381, %v1061, 0
  %v1210 = vsel %vm381, %v1063, 0
  %v1212 = vsel %vm381, %v1066, 0
  %v1214 = vsel %vm381, %v1068, 0
  %v1216 = vsel %vm381, %v1071, 0
  %v1218 = vsel %vm381, %v1073, 0
  %v1220 = vsel %vm381, %v1076, 0
  %v1222 = vsel %vm381, %v1078, 0
  %v1224 = vsel %vm381, %v1081, 0
  %v1226 = vsel %vm381, %v1083, 0
  %v1228 = vsel %vm381, %v1086, 0
  %v1230 = vsel %vm381, %v1088, 0
  %v1232 = vsel %vm381, %v1091, 0
  %v1234 = vsel %vm381, %v1093, 0
  %v1236 = vsel %vm381, %v1096, 0
  %v1238 = vsel %vm381, %v1098, 0
  %v1240 = vsel %vm381, %v1101, 0
  %v1242 = vsel %vm381, %v1103, 0
  %v1244 = vsel %vm381, %v1106, 0
  %v1246 = vsel %vm381, %v1108, 0
  %v1248 = vsel %vm381, %v1111, 0
  %v1250 = vsel %vm381, %v1113, 0
  %v1252 = vsel %vm381, %v1116, 0
  %v1254 = vsel %vm381, %v1118, 0
  %1256 = vmatprep.subr.mxu0 0.0
  %1257 = vmatpush1.xpose.msra.mxu0 %v1128
  %1258 = vmatprep.subr.mxu0 0.0
  %1259 = vmatpush1.xpose.msra.mxu0 %v1130
  %1260 = vmatprep.subr.mxu0 0.0
  %1261 = vmatpush1.xpose.msra.mxu0 %v1132
  %1262 = vmatprep.subr.mxu0 0.0
  %1263 = vmatpush1.xpose.msra.mxu0 %v1134
  %1264 = vmatprep.subr.mxu0 0.0
  %1265 = vmatpush1.xpose.msra.mxu0 %v1136
  %1266 = vmatprep.subr.mxu0 0.0
  %1267 = vmatpush1.xpose.msra.mxu0 %v1138
  %1268 = vmatprep.subr.mxu0 0.0
  %1269 = vmatpush1.xpose.msra.mxu0 %v1140
  %1270 = vmatprep.subr.mxu0 0.0
  %1271 = vmatpush1.xpose.msra.mxu0 %v1142
  %1272 = vmatprep.subr.mxu0 0.0
  %1273 = vmatpush1.xpose.msra.mxu0 %v1144
  %1274 = vmatprep.subr.mxu0 0.0
  %1275 = vmatpush1.xpose.msra.mxu0 %v1146
  %1276 = vmatprep.subr.mxu0 0.0
  %1277 = vmatpush1.xpose.msra.mxu0 %v1148
  %1278 = vmatprep.subr.mxu0 0.0
  %1279 = vmatpush1.xpose.msra.mxu0 %v1150
  %1280 = vmatprep.subr.mxu0 0.0
  %1281 = vmatpush1.xpose.msra.mxu0 %v1152
  %1282 = vmatprep.subr.mxu0 0.0
  %1283 = vmatpush1.xpose.msra.mxu0 %v1154
  %1284 = vmatprep.subr.mxu0 0.0
  %1285 = vmatpush1.xpose.msra.mxu0 %v1156
  %1286 = vmatprep.subr.mxu0 0.0
  %1287 = vmatpush1.xpose.msra.mxu0 %v1158
  %1288 = vmatprep.subr.mxu0 0.0
  %1289 = vmatpush1.xpose.msra.mxu0 %v1160
  %1290 = vmatprep.subr.mxu0 0.0
  %1291 = vmatpush1.xpose.msra.mxu0 %v1162
  %1292 = vmatprep.subr.mxu0 0.0
  %1293 = vmatpush1.xpose.msra.mxu0 %v1164
  %1294 = vmatprep.subr.mxu0 0.0
  %1295 = vmatpush1.xpose.msra.mxu0 %v1166
  %1296 = vmatprep.subr.mxu0 0.0
  %1297 = vmatpush1.xpose.msra.mxu0 %v1168
  %1298 = vmatprep.subr.mxu0 0.0
  %1299 = vmatpush1.xpose.msra.mxu0 %v1170
  %1300 = vmatprep.subr.mxu0 0.0
  %1301 = vmatpush1.xpose.msra.mxu0 %v1172
  %1302 = vmatprep.subr.mxu0 0.0
  %1303 = vmatpush1.xpose.msra.mxu0 %v1174
  %1304 = vmatprep.subr.mxu0 0.0
  %1305 = vmatpush1.xpose.msra.mxu0 %v1176
  %1306 = vmatprep.subr.mxu0 0.0
  %1307 = vmatpush1.xpose.msra.mxu0 %v1178
  %1308 = vmatprep.subr.mxu0 0.0
  %1309 = vmatpush1.xpose.msra.mxu0 %v1180
  %1310 = vmatprep.subr.mxu0 0.0
  %1311 = vmatpush1.xpose.msra.mxu0 %v1182
  %1312 = vmatprep.subr.mxu0 0.0
  %1313 = vmatpush1.xpose.msra.mxu0 %v1184
  %1314 = vmatprep.subr.mxu0 0.0
  %1315 = vmatpush1.xpose.msra.mxu0 %v1186
  %1316 = vmatprep.subr.mxu0 0.0
  %1317 = vmatpush1.xpose.msra.mxu0 %v1188
  %1318 = vmatprep.subr.mxu0 0.0
  %1319 = vmatpush1.xpose.msra.mxu0 %v1190
  %1320 = vmatprep.mubr.f32.mxu0 0.0
  %1321 = vmatmul.mubr.f32.gmra.mrb[0].mxu0 %v1123
  %v1322 = vpop.f32.mrb[0].mxu0
  %v1323 = vadd.f32 0.0, %v1322
  %v1324 = vpop.f32.mrb[0].mxu0
  %v1325 = vadd.f32 0.0, %v1324
  %1326 = vmatprep.mubr.f32.mxu0 0.0
  %1327 = vmatmul.mubr.f32.gmra.mrb[0].mxu0 %v1126
  %v1328 = vpop.f32.mrb[0].mxu0
  %v1329 = vadd.f32 0.0, %v1328
  %v1330 = vpop.f32.mrb[0].mxu0
  %v1331 = vadd.f32 0.0, %v1330
  %1332 = vdwg.mxu0
  %1333 = vmatprep.subr.mxu0 0.0
  %1334 = vmatpush1.xpose.msra.mxu0 %v1192
  %1335 = vmatprep.subr.mxu0 0.0
  %1336 = vmatpush1.xpose.msra.mxu0 %v1194
  %1337 = vmatprep.subr.mxu0 0.0
  %1338 = vmatpush1.xpose.msra.mxu0 %v1196
  %1339 = vmatprep.subr.mxu0 0.0
  %1340 = vmatpush1.xpose.msra.mxu0 %v1198
  %1341 = vmatprep.subr.mxu0 0.0
  %1342 = vmatpush1.xpose.msra.mxu0 %v1200
  %1343 = vmatprep.subr.mxu0 0.0
  %1344 = vmatpush1.xpose.msra.mxu0 %v1202
  %1345 = vmatprep.subr.mxu0 0.0
  %1346 = vmatpush1.xpose.msra.mxu0 %v1204
  %1347 = vmatprep.subr.mxu0 0.0
  %1348 = vmatpush1.xpose.msra.mxu0 %v1206
  %1349 = vmatprep.subr.mxu0 0.0
  %1350 = vmatpush1.xpose.msra.mxu0 %v1208
  %1351 = vmatprep.subr.mxu0 0.0
  %1352 = vmatpush1.xpose.msra.mxu0 %v1210
  %1353 = vmatprep.subr.mxu0 0.0
  %1354 = vmatpush1.xpose.msra.mxu0 %v1212
  %1355 = vmatprep.subr.mxu0 0.0
  %1356 = vmatpush1.xpose.msra.mxu0 %v1214
  %1357 = vmatprep.subr.mxu0 0.0
  %1358 = vmatpush1.xpose.msra.mxu0 %v1216
  %1359 = vmatprep.subr.mxu0 0.0
  %1360 = vmatpush1.xpose.msra.mxu0 %v1218
  %1361 = vmatprep.subr.mxu0 0.0
  %1362 = vmatpush1.xpose.msra.mxu0 %v1220
  %1363 = vmatprep.subr.mxu0 0.0
  %1364 = vmatpush1.xpose.msra.mxu0 %v1222
  %1365 = vmatprep.subr.mxu0 0.0
  %1366 = vmatpush1.xpose.msra.mxu0 %v1224
  %1367 = vmatprep.subr.mxu0 0.0
  %1368 = vmatpush1.xpose.msra.mxu0 %v1226
  %1369 = vmatprep.subr.mxu0 0.0
  %1370 = vmatpush1.xpose.msra.mxu0 %v1228
  %1371 = vmatprep.subr.mxu0 0.0
  %1372 = vmatpush1.xpose.msra.mxu0 %v1230
  %1373 = vmatprep.subr.mxu0 0.0
  %1374 = vmatpush1.xpose.msra.mxu0 %v1232
  %1375 = vmatprep.subr.mxu0 0.0
  %1376 = vmatpush1.xpose.msra.mxu0 %v1234
  %1377 = vmatprep.subr.mxu0 0.0
  %1378 = vmatpush1.xpose.msra.mxu0 %v1236
  %1379 = vmatprep.subr.mxu0 0.0
  %1380 = vmatpush1.xpose.msra.mxu0 %v1238
  %1381 = vmatprep.subr.mxu0 0.0
  %1382 = vmatpush1.xpose.msra.mxu0 %v1240
  %1383 = vmatprep.subr.mxu0 0.0
  %1384 = vmatpush1.xpose.msra.mxu0 %v1242
  %1385 = vmatprep.subr.mxu0 0.0
  %1386 = vmatpush1.xpose.msra.mxu0 %v1244
  %1387 = vmatprep.subr.mxu0 0.0
  %1388 = vmatpush1.xpose.msra.mxu0 %v1246
  %1389 = vmatprep.subr.mxu0 0.0
  %1390 = vmatpush1.xpose.msra.mxu0 %v1248
  %1391 = vmatprep.subr.mxu0 0.0
  %1392 = vmatpush1.xpose.msra.mxu0 %v1250
  %1393 = vmatprep.subr.mxu0 0.0
  %1394 = vmatpush1.xpose.msra.mxu0 %v1252
  %1395 = vmatprep.subr.mxu0 0.0
  %1396 = vmatpush1.xpose.msra.mxu0 %v1254
  %1397 = vmatprep.mubr.f32.mxu0 0.0
  %1398 = vmatmul.mubr.f32.gmra.mrb[0].mxu0 %v1123
  %v1399 = vpop.f32.mrb[0].mxu0
  %v1400 = vadd.f32 0.0, %v1399
  %v1401 = vpop.f32.mrb[0].mxu0
  %v1402 = vadd.f32 0.0, %v1401
  %1403 = vmatprep.mubr.f32.mxu0 0.0
  %1404 = vmatmul.mubr.f32.gmra.mrb[0].mxu0 %v1126
  %v1405 = vpop.f32.mrb[0].mxu0
  %v1406 = vadd.f32 0.0, %v1405
  %v1407 = vpop.f32.mrb[0].mxu0
  %v1408 = vadd.f32 0.0, %v1407
  %1409 = vdwg.mxu0
  %v1410 = vadd.f32 %v871, %v1323
  %v1411 = vadd.f32 %v873, %v1325
  %v1412 = vadd.f32 %v948, %v1400
  %v1413 = vadd.f32 %v950, %v1402
  %v1414 = vadd.f32 %v877, %v1329
  %v1415 = vadd.f32 %v879, %v1331
  %v1416 = vadd.f32 %v954, %v1406
  %v1417 = vadd.f32 %v956, %v1408
  %s1418 = scalar_lea.vmem %s1, 48
  %v1419 = vld [vmem:[%s1418] sm:$0xff]
  %v1420 = vld [vmem:[%s1418 + $0x8] sm:$0xff]
  %v1422 = vsel %vm381, %v1419, 0
  %v1425 = vsel %vm381, %v1420, 0
  %v1428 = vsel %vm381, %v59, 0
  %v1431 = vsel %vm381, %v60, 0
  %v1434 = vsel %vm381, %v113, 0
  %v1437 = vsel %vm381, %v114, 0
  %1439 = vmatprep.subr.mxu0 0.0
  %1440 = vmatpush1.xpose.msra.mxu0 %v680
  %1441 = vmatprep.subr.mxu0 0.0
  %1442 = vmatpush1.xpose.msra.mxu0 %v682
  %1443 = vmatprep.subr.mxu0 0.0
  %1444 = vmatpush1.xpose.msra.mxu0 %v684
  %1445 = vmatprep.subr.mxu0 0.0
  %1446 = vmatpush1.xpose.msra.mxu0 %v686
  %1447 = vmatprep.subr.mxu0 0.0
  %1448 = vmatpush1.xpose.msra.mxu0 %v688
  %1449 = vmatprep.subr.mxu0 0.0
  %1450 = vmatpush1.xpose.msra.mxu0 %v690
  %1451 = vmatprep.subr.mxu0 0.0
  %1452 = vmatpush1.xpose.msra.mxu0 %v692
  %1453 = vmatprep.subr.mxu0 0.0
  %1454 = vmatpush1.xpose.msra.mxu0 %v694
  %1455 = vmatprep.subr.mxu0 0.0
  %1456 = vmatpush1.xpose.msra.mxu0 %v696
  %1457 = vmatprep.subr.mxu0 0.0
  %1458 = vmatpush1.xpose.msra.mxu0 %v698
  %1459 = vmatprep.subr.mxu0 0.0
  %1460 = vmatpush1.xpose.msra.mxu0 %v700
  %1461 = vmatprep.subr.mxu0 0.0
  %1462 = vmatpush1.xpose.msra.mxu0 %v702
  %1463 = vmatprep.subr.mxu0 0.0
  %1464 = vmatpush1.xpose.msra.mxu0 %v704
  %1465 = vmatprep.subr.mxu0 0.0
  %1466 = vmatpush1.xpose.msra.mxu0 %v706
  %1467 = vmatprep.subr.mxu0 0.0
  %1468 = vmatpush1.xpose.msra.mxu0 %v708
  %1469 = vmatprep.subr.mxu0 0.0
  %1470 = vmatpush1.xpose.msra.mxu0 %v710
  %1471 = vmatprep.subr.mxu0 0.0
  %1472 = vmatpush1.xpose.msra.mxu0 %v712
  %1473 = vmatprep.subr.mxu0 0.0
  %1474 = vmatpush1.xpose.msra.mxu0 %v714
  %1475 = vmatprep.subr.mxu0 0.0
  %1476 = vmatpush1.xpose.msra.mxu0 %v716
  %1477 = vmatprep.subr.mxu0 0.0
  %1478 = vmatpush1.xpose.msra.mxu0 %v718
  %1479 = vmatprep.subr.mxu0 0.0
  %1480 = vmatpush1.xpose.msra.mxu0 %v720
  %1481 = vmatprep.subr.mxu0 0.0
  %1482 = vmatpush1.xpose.msra.mxu0 %v722
  %1483 = vmatprep.subr.mxu0 0.0
  %1484 = vmatpush1.xpose.msra.mxu0 %v724
  %1485 = vmatprep.subr.mxu0 0.0
  %1486 = vmatpush1.xpose.msra.mxu0 %v726
  %1487 = vmatprep.subr.mxu0 0.0
  %1488 = vmatpush1.xpose.msra.mxu0 %v728
  %1489 = vmatprep.subr.mxu0 0.0
  %1490 = vmatpush1.xpose.msra.mxu0 %v730
  %1491 = vmatprep.subr.mxu0 0.0
  %1492 = vmatpush1.xpose.msra.mxu0 %v732
  %1493 = vmatprep.subr.mxu0 0.0
  %1494 = vmatpush1.xpose.msra.mxu0 %v734
  %1495 = vmatprep.subr.mxu0 0.0
  %1496 = vmatpush1.xpose.msra.mxu0 %v736
  %1497 = vmatprep.subr.mxu0 0.0
  %1498 = vmatpush1.xpose.msra.mxu0 %v738
  %1499 = vmatprep.subr.mxu0 0.0
  %1500 = vmatpush1.xpose.msra.mxu0 %v1428
  %1501 = vmatprep.subr.mxu0 0.0
  %1502 = vmatpush1.xpose.msra.mxu0 %v1431
  %1503 = vmatprep.mubr.f32.mxu0 0.0
  %1504 = vmatmul.mubr.f32.gmra.mrb[0].mxu0 %v1422
  %v1505 = vpop.f32.mrb[0].mxu0
  %v1506 = vadd.f32 0.0, %v1505
  %v1507 = vpop.f32.mrb[0].mxu0
  %v1508 = vadd.f32 0.0, %v1507
  %1509 = vmatprep.mubr.f32.mxu0 0.0
  %1510 = vmatmul.mubr.f32.gmra.mrb[0].mxu0 %v1425
  %v1511 = vpop.f32.mrb[0].mxu0
  %v1512 = vadd.f32 0.0, %v1511
  %v1513 = vpop.f32.mrb[0].mxu0
  %v1514 = vadd.f32 0.0, %v1513
  %1515 = vdwg.mxu0
  %1516 = vmatprep.subr.mxu0 0.0
  %1517 = vmatpush1.xpose.msra.mxu0 %v744
  %1518 = vmatprep.subr.mxu0 0.0
  %1519 = vmatpush1.xpose.msra.mxu0 %v746
  %1520 = vmatprep.subr.mxu0 0.0
  %1521 = vmatpush1.xpose.msra.mxu0 %v748
  %1522 = vmatprep.subr.mxu0 0.0
  %1523 = vmatpush1.xpose.msra.mxu0 %v750
  %1524 = vmatprep.subr.mxu0 0.0
  %1525 = vmatpush1.xpose.msra.mxu0 %v752
  %1526 = vmatprep.subr.mxu0 0.0
  %1527 = vmatpush1.xpose.msra.mxu0 %v754
  %1528 = vmatprep.subr.mxu0 0.0
  %1529 = vmatpush1.xpose.msra.mxu0 %v756
  %1530 = vmatprep.subr.mxu0 0.0
  %1531 = vmatpush1.xpose.msra.mxu0 %v758
  %1532 = vmatprep.subr.mxu0 0.0
  %1533 = vmatpush1.xpose.msra.mxu0 %v760
  %1534 = vmatprep.subr.mxu0 0.0
  %1535 = vmatpush1.xpose.msra.mxu0 %v762
  %1536 = vmatprep.subr.mxu0 0.0
  %1537 = vmatpush1.xpose.msra.mxu0 %v764
  %1538 = vmatprep.subr.mxu0 0.0
  %1539 = vmatpush1.xpose.msra.mxu0 %v766
  %1540 = vmatprep.subr.mxu0 0.0
  %1541 = vmatpush1.xpose.msra.mxu0 %v768
  %1542 = vmatprep.subr.mxu0 0.0
  %1543 = vmatpush1.xpose.msra.mxu0 %v770
  %1544 = vmatprep.subr.mxu0 0.0
  %1545 = vmatpush1.xpose.msra.mxu0 %v772
  %1546 = vmatprep.subr.mxu0 0.0
  %1547 = vmatpush1.xpose.msra.mxu0 %v774
  %1548 = vmatprep.subr.mxu0 0.0
  %1549 = vmatpush1.xpose.msra.mxu0 %v776
  %1550 = vmatprep.subr.mxu0 0.0
  %1551 = vmatpush1.xpose.msra.mxu0 %v778
  %1552 = vmatprep.subr.mxu0 0.0
  %1553 = vmatpush1.xpose.msra.mxu0 %v780
  %1554 = vmatprep.subr.mxu0 0.0
  %1555 = vmatpush1.xpose.msra.mxu0 %v782
  %1556 = vmatprep.subr.mxu0 0.0
  %1557 = vmatpush1.xpose.msra.mxu0 %v784
  %1558 = vmatprep.subr.mxu0 0.0
  %1559 = vmatpush1.xpose.msra.mxu0 %v786
  %1560 = vmatprep.subr.mxu0 0.0
  %1561 = vmatpush1.xpose.msra.mxu0 %v788
  %1562 = vmatprep.subr.mxu0 0.0
  %1563 = vmatpush1.xpose.msra.mxu0 %v790
  %1564 = vmatprep.subr.mxu0 0.0
  %1565 = vmatpush1.xpose.msra.mxu0 %v792
  %1566 = vmatprep.subr.mxu0 0.0
  %1567 = vmatpush1.xpose.msra.mxu0 %v794
  %1568 = vmatprep.subr.mxu0 0.0
  %1569 = vmatpush1.xpose.msra.mxu0 %v796
  %1570 = vmatprep.subr.mxu0 0.0
  %1571 = vmatpush1.xpose.msra.mxu0 %v798
  %1572 = vmatprep.subr.mxu0 0.0
  %1573 = vmatpush1.xpose.msra.mxu0 %v800
  %1574 = vmatprep.subr.mxu0 0.0
  %1575 = vmatpush1.xpose.msra.mxu0 %v802
  %1576 = vmatprep.subr.mxu0 0.0
  %1577 = vmatpush1.xpose.msra.mxu0 %v1434
  %1578 = vmatprep.subr.mxu0 0.0
  %1579 = vmatpush1.xpose.msra.mxu0 %v1437
  %1580 = vmatprep.mubr.f32.mxu0 0.0
  %1581 = vmatmul.mubr.f32.gmra.mrb[0].mxu0 %v1422
  %v1582 = vpop.f32.mrb[0].mxu0
  %v1583 = vadd.f32 0.0, %v1582
  %v1584 = vpop.f32.mrb[0].mxu0
  %v1585 = vadd.f32 0.0, %v1584
  %1586 = vmatprep.mubr.f32.mxu0 0.0
  %1587 = vmatmul.mubr.f32.gmra.mrb[0].mxu0 %v1425
  %v1588 = vpop.f32.mrb[0].mxu0
  %v1589 = vadd.f32 0.0, %v1588
  %v1590 = vpop.f32.mrb[0].mxu0
  %v1591 = vadd.f32 0.0, %v1590
  %1592 = vdwg.mxu0
  %v1593 = vadd.f32 %v1410, %v1506
  %v1594 = vadd.f32 %v1411, %v1508
  %v1595 = vadd.f32 %v1412, %v1583
  %v1596 = vadd.f32 %v1413, %v1585
  %v1597 = vadd.f32 %v1414, %v1512
  %v1598 = vadd.f32 %v1415, %v1514
  %v1599 = vadd.f32 %v1416, %v1589
  %v1600 = vadd.f32 %v1417, %v1591
  %v1603 = vrot.slane %v59, 1
  %v1604 = vrot.slane %v60, 1
  %v1605 = vsel %vm217, %v1603, %v1604
  %v1606 = vrot.slane %v61, 1
  %v1607 = vsel %vm217, %v1604, %v1606
  %v1608 = vrot.slane %v113, 1
  %v1609 = vrot.slane %v114, 1
  %v1610 = vsel %vm217, %v1608, %v1609
  %v1611 = vrot.slane %v115, 1
  %v1612 = vsel %vm217, %v1609, %v1611
  %s1613 = scalar_lea.vmem %s1, 64
  %v1614 = vld [vmem:[%s1613] sm:$0xff]
  %v1615 = vld [vmem:[%s1613 + $0x8] sm:$0xff]
  %v1617 = vsel %vm381, %v1614, 0
  %v1620 = vsel %vm381, %v1615, 0
  %v1622 = vsel %vm381, %v1605, 0
  %v1624 = vsel %vm381, %v1607, 0
  %v1626 = vsel %vm381, %v1610, 0
  %v1628 = vsel %vm381, %v1612, 0
  %1630 = vmatprep.subr.mxu0 0.0
  %1631 = vmatpush1.xpose.msra.mxu0 %v392
  %1632 = vmatprep.subr.mxu0 0.0
  %1633 = vmatpush1.xpose.msra.mxu0 %v394
  %1634 = vmatprep.subr.mxu0 0.0
  %1635 = vmatpush1.xpose.msra.mxu0 %v396
  %1636 = vmatprep.subr.mxu0 0.0
  %1637 = vmatpush1.xpose.msra.mxu0 %v398
  %1638 = vmatprep.subr.mxu0 0.0
  %1639 = vmatpush1.xpose.msra.mxu0 %v400
  %1640 = vmatprep.subr.mxu0 0.0
  %1641 = vmatpush1.xpose.msra.mxu0 %v402
  %1642 = vmatprep.subr.mxu0 0.0
  %1643 = vmatpush1.xpose.msra.mxu0 %v404
  %1644 = vmatprep.subr.mxu0 0.0
  %1645 = vmatpush1.xpose.msra.mxu0 %v406
  %1646 = vmatprep.subr.mxu0 0.0
  %1647 = vmatpush1.xpose.msra.mxu0 %v408
  %1648 = vmatprep.subr.mxu0 0.0
  %1649 = vmatpush1.xpose.msra.mxu0 %v410
  %1650 = vmatprep.subr.mxu0 0.0
  %1651 = vmatpush1.xpose.msra.mxu0 %v412
  %1652 = vmatprep.subr.mxu0 0.0
  %1653 = vmatpush1.xpose.msra.mxu0 %v414
  %1654 = vmatprep.subr.mxu0 0.0
  %1655 = vmatpush1.xpose.msra.mxu0 %v416
  %1656 = vmatprep.subr.mxu0 0.0
  %1657 = vmatpush1.xpose.msra.mxu0 %v418
  %1658 = vmatprep.subr.mxu0 0.0
  %1659 = vmatpush1.xpose.msra.mxu0 %v420
  %1660 = vmatprep.subr.mxu0 0.0
  %1661 = vmatpush1.xpose.msra.mxu0 %v422
  %1662 = vmatprep.subr.mxu0 0.0
  %1663 = vmatpush1.xpose.msra.mxu0 %v424
  %1664 = vmatprep.subr.mxu0 0.0
  %1665 = vmatpush1.xpose.msra.mxu0 %v426
  %1666 = vmatprep.subr.mxu0 0.0
  %1667 = vmatpush1.xpose.msra.mxu0 %v428
  %1668 = vmatprep.subr.mxu0 0.0
  %1669 = vmatpush1.xpose.msra.mxu0 %v430
  %1670 = vmatprep.subr.mxu0 0.0
  %1671 = vmatpush1.xpose.msra.mxu0 %v432
  %1672 = vmatprep.subr.mxu0 0.0
  %1673 = vmatpush1.xpose.msra.mxu0 %v434
  %1674 = vmatprep.subr.mxu0 0.0
  %1675 = vmatpush1.xpose.msra.mxu0 %v436
  %1676 = vmatprep.subr.mxu0 0.0
  %1677 = vmatpush1.xpose.msra.mxu0 %v438
  %1678 = vmatprep.subr.mxu0 0.0
  %1679 = vmatpush1.xpose.msra.mxu0 %v440
  %1680 = vmatprep.subr.mxu0 0.0
  %1681 = vmatpush1.xpose.msra.mxu0 %v442
  %1682 = vmatprep.subr.mxu0 0.0
  %1683 = vmatpush1.xpose.msra.mxu0 %v444
  %1684 = vmatprep.subr.mxu0 0.0
  %1685 = vmatpush1.xpose.msra.mxu0 %v446
  %1686 = vmatprep.subr.mxu0 0.0
  %1687 = vmatpush1.xpose.msra.mxu0 %v448
  %1688 = vmatprep.subr.mxu0 0.0
  %1689 = vmatpush1.xpose.msra.mxu0 %v450
  %1690 = vmatprep.subr.mxu0 0.0
  %1691 = vmatpush1.xpose.msra.mxu0 %v1622
  %1692 = vmatprep.subr.mxu0 0.0
  %1693 = vmatpush1.xpose.msra.mxu0 %v1624
  %1694 = vmatprep.mubr.f32.mxu0 0.0
  %1695 = vmatmul.mubr.f32.gmra.mrb[0].mxu0 %v1617
  %v1696 = vpop.f32.mrb[0].mxu0
  %v1697 = vadd.f32 0.0, %v1696
  %v1698 = vpop.f32.mrb[0].mxu0
  %v1699 = vadd.f32 0.0, %v1698
  %1700 = vmatprep.mubr.f32.mxu0 0.0
  %1701 = vmatmul.mubr.f32.gmra.mrb[0].mxu0 %v1620
  %v1702 = vpop.f32.mrb[0].mxu0
  %v1703 = vadd.f32 0.0, %v1702
  %v1704 = vpop.f32.mrb[0].mxu0
  %v1705 = vadd.f32 0.0, %v1704
  %1706 = vdwg.mxu0
  %1707 = vmatprep.subr.mxu0 0.0
  %1708 = vmatpush1.xpose.msra.mxu0 %v456
  %1709 = vmatprep.subr.mxu0 0.0
  %1710 = vmatpush1.xpose.msra.mxu0 %v458
  %1711 = vmatprep.subr.mxu0 0.0
  %1712 = vmatpush1.xpose.msra.mxu0 %v460
  %1713 = vmatprep.subr.mxu0 0.0
  %1714 = vmatpush1.xpose.msra.mxu0 %v462
  %1715 = vmatprep.subr.mxu0 0.0
  %1716 = vmatpush1.xpose.msra.mxu0 %v464
  %1717 = vmatprep.subr.mxu0 0.0
  %1718 = vmatpush1.xpose.msra.mxu0 %v466
  %1719 = vmatprep.subr.mxu0 0.0
  %1720 = vmatpush1.xpose.msra.mxu0 %v468
  %1721 = vmatprep.subr.mxu0 0.0
  %1722 = vmatpush1.xpose.msra.mxu0 %v470
  %1723 = vmatprep.subr.mxu0 0.0
  %1724 = vmatpush1.xpose.msra.mxu0 %v472
  %1725 = vmatprep.subr.mxu0 0.0
  %1726 = vmatpush1.xpose.msra.mxu0 %v474
  %1727 = vmatprep.subr.mxu0 0.0
  %1728 = vmatpush1.xpose.msra.mxu0 %v476
  %1729 = vmatprep.subr.mxu0 0.0
  %1730 = vmatpush1.xpose.msra.mxu0 %v478
  %1731 = vmatprep.subr.mxu0 0.0
  %1732 = vmatpush1.xpose.msra.mxu0 %v480
  %1733 = vmatprep.subr.mxu0 0.0
  %1734 = vmatpush1.xpose.msra.mxu0 %v482
  %1735 = vmatprep.subr.mxu0 0.0
  %1736 = vmatpush1.xpose.msra.mxu0 %v484
  %1737 = vmatprep.subr.mxu0 0.0
  %1738 = vmatpush1.xpose.msra.mxu0 %v486
  %1739 = vmatprep.subr.mxu0 0.0
  %1740 = vmatpush1.xpose.msra.mxu0 %v488
  %1741 = vmatprep.subr.mxu0 0.0
  %1742 = vmatpush1.xpose.msra.mxu0 %v490
  %1743 = vmatprep.subr.mxu0 0.0
  %1744 = vmatpush1.xpose.msra.mxu0 %v492
  %1745 = vmatprep.subr.mxu0 0.0
  %1746 = vmatpush1.xpose.msra.mxu0 %v494
  %1747 = vmatprep.subr.mxu0 0.0
  %1748 = vmatpush1.xpose.msra.mxu0 %v496
  %1749 = vmatprep.subr.mxu0 0.0
  %1750 = vmatpush1.xpose.msra.mxu0 %v498
  %1751 = vmatprep.subr.mxu0 0.0
  %1752 = vmatpush1.xpose.msra.mxu0 %v500
  %1753 = vmatprep.subr.mxu0 0.0
  %1754 = vmatpush1.xpose.msra.mxu0 %v502
  %1755 = vmatprep.subr.mxu0 0.0
  %1756 = vmatpush1.xpose.msra.mxu0 %v504
  %1757 = vmatprep.subr.mxu0 0.0
  %1758 = vmatpush1.xpose.msra.mxu0 %v506
  %1759 = vmatprep.subr.mxu0 0.0
  %1760 = vmatpush1.xpose.msra.mxu0 %v508
  %1761 = vmatprep.subr.mxu0 0.0
  %1762 = vmatpush1.xpose.msra.mxu0 %v510
  %1763 = vmatprep.subr.mxu0 0.0
  %1764 = vmatpush1.xpose.msra.mxu0 %v512
  %1765 = vmatprep.subr.mxu0 0.0
  %1766 = vmatpush1.xpose.msra.mxu0 %v514
  %1767 = vmatprep.subr.mxu0 0.0
  %1768 = vmatpush1.xpose.msra.mxu0 %v1626
  %1769 = vmatprep.subr.mxu0 0.0
  %1770 = vmatpush1.xpose.msra.mxu0 %v1628
  %1771 = vmatprep.mubr.f32.mxu0 0.0
  %1772 = vmatmul.mubr.f32.gmra.mrb[0].mxu0 %v1617
  %v1773 = vpop.f32.mrb[0].mxu0
  %v1774 = vadd.f32 0.0, %v1773
  %v1775 = vpop.f32.mrb[0].mxu0
  %v1776 = vadd.f32 0.0, %v1775
  %1777 = vmatprep.mubr.f32.mxu0 0.0
  %1778 = vmatmul.mubr.f32.gmra.mrb[0].mxu0 %v1620
  %v1779 = vpop.f32.mrb[0].mxu0
  %v1780 = vadd.f32 0.0, %v1779
  %v1781 = vpop.f32.mrb[0].mxu0
  %v1782 = vadd.f32 0.0, %v1781
  %1783 = vdwg.mxu0
  %v1784 = vadd.f32 %v1593, %v1697
  %v1785 = vadd.f32 %v1594, %v1699
  %v1786 = vadd.f32 %v1595, %v1774
  %v1787 = vadd.f32 %v1596, %v1776
  %v1788 = vadd.f32 %v1597, %v1703
  %v1789 = vadd.f32 %v1598, %v1705
  %v1790 = vadd.f32 %v1599, %v1780
  %v1791 = vadd.f32 %v1600, %v1782
  %v1792 = vrot.slane %v59, 2
  %v1793 = vrot.slane %v60, 2
  %v1794 = vsel %vm958, %v1792, %v1793
  %v1795 = vrot.slane %v61, 2
  %v1796 = vsel %vm958, %v1793, %v1795
  %v1797 = vrot.slane %v113, 2
  %v1798 = vrot.slane %v114, 2
  %v1799 = vsel %vm958, %v1797, %v1798
  %v1800 = vrot.slane %v115, 2
  %v1801 = vsel %vm958, %v1798, %v1800
  %s1802 = scalar_lea.vmem %s1, 80
  %v1803 = vld [vmem:[%s1802] sm:$0xff]
  %v1804 = vld [vmem:[%s1802 + $0x8] sm:$0xff]
  %v1806 = vsel %vm381, %v1803, 0
  %v1809 = vsel %vm381, %v1804, 0
  %v1811 = vsel %vm381, %v1794, 0
  %v1813 = vsel %vm381, %v1796, 0
  %v1815 = vsel %vm381, %v1799, 0
  %v1817 = vsel %vm381, %v1801, 0
  %1819 = vmatprep.subr.mxu0 0.0
  %1820 = vmatpush1.xpose.msra.mxu0 %v1132
  %1821 = vmatprep.subr.mxu0 0.0
  %1822 = vmatpush1.xpose.msra.mxu0 %v1134
  %1823 = vmatprep.subr.mxu0 0.0
  %1824 = vmatpush1.xpose.msra.mxu0 %v1136
  %1825 = vmatprep.subr.mxu0 0.0
  %1826 = vmatpush1.xpose.msra.mxu0 %v1138
  %1827 = vmatprep.subr.mxu0 0.0
  %1828 = vmatpush1.xpose.msra.mxu0 %v1140
  %1829 = vmatprep.subr.mxu0 0.0
  %1830 = vmatpush1.xpose.msra.mxu0 %v1142
  %1831 = vmatprep.subr.mxu0 0.0
  %1832 = vmatpush1.xpose.msra.mxu0 %v1144
  %1833 = vmatprep.subr.mxu0 0.0
  %1834 = vmatpush1.xpose.msra.mxu0 %v1146
  %1835 = vmatprep.subr.mxu0 0.0
  %1836 = vmatpush1.xpose.msra.mxu0 %v1148
  %1837 = vmatprep.subr.mxu0 0.0
  %1838 = vmatpush1.xpose.msra.mxu0 %v1150
  %1839 = vmatprep.subr.mxu0 0.0
  %1840 = vmatpush1.xpose.msra.mxu0 %v1152
  %1841 = vmatprep.subr.mxu0 0.0
  %1842 = vmatpush1.xpose.msra.mxu0 %v1154
  %1843 = vmatprep.subr.mxu0 0.0
  %1844 = vmatpush1.xpose.msra.mxu0 %v1156
  %1845 = vmatprep.subr.mxu0 0.0
  %1846 = vmatpush1.xpose.msra.mxu0 %v1158
  %1847 = vmatprep.subr.mxu0 0.0
  %1848 = vmatpush1.xpose.msra.mxu0 %v1160
  %1849 = vmatprep.subr.mxu0 0.0
  %1850 = vmatpush1.xpose.msra.mxu0 %v1162
  %1851 = vmatprep.subr.mxu0 0.0
  %1852 = vmatpush1.xpose.msra.mxu0 %v1164
  %1853 = vmatprep.subr.mxu0 0.0
  %1854 = vmatpush1.xpose.msra.mxu0 %v1166
  %1855 = vmatprep.subr.mxu0 0.0
  %1856 = vmatpush1.xpose.msra.mxu0 %v1168
  %1857 = vmatprep.subr.mxu0 0.0
  %1858 = vmatpush1.xpose.msra.mxu0 %v1170
  %1859 = vmatprep.subr.mxu0 0.0
  %1860 = vmatpush1.xpose.msra.mxu0 %v1172
  %1861 = vmatprep.subr.mxu0 0.0
  %1862 = vmatpush1.xpose.msra.mxu0 %v1174
  %1863 = vmatprep.subr.mxu0 0.0
  %1864 = vmatpush1.xpose.msra.mxu0 %v1176
  %1865 = vmatprep.subr.mxu0 0.0
  %1866 = vmatpush1.xpose.msra.mxu0 %v1178
  %1867 = vmatprep.subr.mxu0 0.0
  %1868 = vmatpush1.xpose.msra.mxu0 %v1180
  %1869 = vmatprep.subr.mxu0 0.0
  %1870 = vmatpush1.xpose.msra.mxu0 %v1182
  %1871 = vmatprep.subr.mxu0 0.0
  %1872 = vmatpush1.xpose.msra.mxu0 %v1184
  %1873 = vmatprep.subr.mxu0 0.0
  %1874 = vmatpush1.xpose.msra.mxu0 %v1186
  %1875 = vmatprep.subr.mxu0 0.0
  %1876 = vmatpush1.xpose.msra.mxu0 %v1188
  %1877 = vmatprep.subr.mxu0 0.0
  %1878 = vmatpush1.xpose.msra.mxu0 %v1190
  %1879 = vmatprep.subr.mxu0 0.0
  %1880 = vmatpush1.xpose.msra.mxu0 %v1811
  %1881 = vmatprep.subr.mxu0 0.0
  %1882 = vmatpush1.xpose.msra.mxu0 %v1813
  %1883 = vmatprep.mubr.f32.mxu0 0.0
  %1884 = vmatmul.mubr.f32.gmra.mrb[0].mxu0 %v1806
  %v1885 = vpop.f32.mrb[0].mxu0
  %v1886 = vadd.f32 0.0, %v1885
  %v1887 = vpop.f32.mrb[0].mxu0
  %v1888 = vadd.f32 0.0, %v1887
  %1889 = vmatprep.mubr.f32.mxu0 0.0
  %1890 = vmatmul.mubr.f32.gmra.mrb[0].mxu0 %v1809
  %v1891 = vpop.f32.mrb[0].mxu0
  %v1892 = vadd.f32 0.0, %v1891
  %v1893 = vpop.f32.mrb[0].mxu0
  %v1894 = vadd.f32 0.0, %v1893
  %1895 = vdwg.mxu0
  %1896 = vmatprep.subr.mxu0 0.0
  %1897 = vmatpush1.xpose.msra.mxu0 %v1196
  %1898 = vmatprep.subr.mxu0 0.0
  %1899 = vmatpush1.xpose.msra.mxu0 %v1198
  %1900 = vmatprep.subr.mxu0 0.0
  %1901 = vmatpush1.xpose.msra.mxu0 %v1200
  %1902 = vmatprep.subr.mxu0 0.0
  %1903 = vmatpush1.xpose.msra.mxu0 %v1202
  %1904 = vmatprep.subr.mxu0 0.0
  %1905 = vmatpush1.xpose.msra.mxu0 %v1204
  %1906 = vmatprep.subr.mxu0 0.0
  %1907 = vmatpush1.xpose.msra.mxu0 %v1206
  %1908 = vmatprep.subr.mxu0 0.0
  %1909 = vmatpush1.xpose.msra.mxu0 %v1208
  %1910 = vmatprep.subr.mxu0 0.0
  %1911 = vmatpush1.xpose.msra.mxu0 %v1210
  %1912 = vmatprep.subr.mxu0 0.0
  %1913 = vmatpush1.xpose.msra.mxu0 %v1212
  %1914 = vmatprep.subr.mxu0 0.0
  %1915 = vmatpush1.xpose.msra.mxu0 %v1214
  %1916 = vmatprep.subr.mxu0 0.0
  %1917 = vmatpush1.xpose.msra.mxu0 %v1216
  %1918 = vmatprep.subr.mxu0 0.0
  %1919 = vmatpush1.xpose.msra.mxu0 %v1218
  %1920 = vmatprep.subr.mxu0 0.0
  %1921 = vmatpush1.xpose.msra.mxu0 %v1220
  %1922 = vmatprep.subr.mxu0 0.0
  %1923 = vmatpush1.xpose.msra.mxu0 %v1222
  %1924 = vmatprep.subr.mxu0 0.0
  %1925 = vmatpush1.xpose.msra.mxu0 %v1224
  %1926 = vmatprep.subr.mxu0 0.0
  %1927 = vmatpush1.xpose.msra.mxu0 %v1226
  %1928 = vmatprep.subr.mxu0 0.0
  %1929 = vmatpush1.xpose.msra.mxu0 %v1228
  %1930 = vmatprep.subr.mxu0 0.0
  %1931 = vmatpush1.xpose.msra.mxu0 %v1230
  %1932 = vmatprep.subr.mxu0 0.0
  %1933 = vmatpush1.xpose.msra.mxu0 %v1232
  %1934 = vmatprep.subr.mxu0 0.0
  %1935 = vmatpush1.xpose.msra.mxu0 %v1234
  %1936 = vmatprep.subr.mxu0 0.0
  %1937 = vmatpush1.xpose.msra.mxu0 %v1236
  %1938 = vmatprep.subr.mxu0 0.0
  %1939 = vmatpush1.xpose.msra.mxu0 %v1238
  %1940 = vmatprep.subr.mxu0 0.0
  %1941 = vmatpush1.xpose.msra.mxu0 %v1240
  %1942 = vmatprep.subr.mxu0 0.0
  %1943 = vmatpush1.xpose.msra.mxu0 %v1242
  %1944 = vmatprep.subr.mxu0 0.0
  %1945 = vmatpush1.xpose.msra.mxu0 %v1244
  %1946 = vmatprep.subr.mxu0 0.0
  %1947 = vmatpush1.xpose.msra.mxu0 %v1246
  %1948 = vmatprep.subr.mxu0 0.0
  %1949 = vmatpush1.xpose.msra.mxu0 %v1248
  %1950 = vmatprep.subr.mxu0 0.0
  %1951 = vmatpush1.xpose.msra.mxu0 %v1250
  %1952 = vmatprep.subr.mxu0 0.0
  %1953 = vmatpush1.xpose.msra.mxu0 %v1252
  %1954 = vmatprep.subr.mxu0 0.0
  %1955 = vmatpush1.xpose.msra.mxu0 %v1254
  %1956 = vmatprep.subr.mxu0 0.0
  %1957 = vmatpush1.xpose.msra.mxu0 %v1815
  %1958 = vmatprep.subr.mxu0 0.0
  %1959 = vmatpush1.xpose.msra.mxu0 %v1817
  %1960 = vmatprep.mubr.f32.mxu0 0.0
  %1961 = vmatmul.mubr.f32.gmra.mrb[0].mxu0 %v1806
  %v1962 = vpop.f32.mrb[0].mxu0
  %v1963 = vadd.f32 0.0, %v1962
  %v1964 = vpop.f32.mrb[0].mxu0
  %v1965 = vadd.f32 0.0, %v1964
  %1966 = vmatprep.mubr.f32.mxu0 0.0
  %1967 = vmatmul.mubr.f32.gmra.mrb[0].mxu0 %v1809
  %v1968 = vpop.f32.mrb[0].mxu0
  %v1969 = vadd.f32 0.0, %v1968
  %v1970 = vpop.f32.mrb[0].mxu0
  %v1971 = vadd.f32 0.0, %v1970
  %1972 = vdwg.mxu0
  %v1973 = vadd.f32 %v1784, %v1886
  %v1974 = vadd.f32 %v1785, %v1888
  %v1975 = vadd.f32 %v1786, %v1963
  %v1976 = vadd.f32 %v1787, %v1965
  %v1977 = vadd.f32 %v1788, %v1892
  %v1978 = vadd.f32 %v1789, %v1894
  %v1979 = vadd.f32 %v1790, %v1969
  %v1980 = vadd.f32 %v1791, %v1971
  %s1981 = scalar_lea.vmem %s1, 96
  %v1982 = vld [vmem:[%s1981] sm:$0xff]
  %v1983 = vld [vmem:[%s1981 + $0x8] sm:$0xff]
  %v1985 = vsel %vm381, %v1982, 0
  %v1988 = vsel %vm381, %v1983, 0
  %v1991 = vsel %vm381, %v62, 0
  %v1994 = vsel %vm381, %v63, 0
  %v1997 = vsel %vm381, %v116, 0
  %v2000 = vsel %vm381, %v117, 0
  %2002 = vmatprep.subr.mxu0 0.0
  %2003 = vmatpush1.xpose.msra.mxu0 %v684
  %2004 = vmatprep.subr.mxu0 0.0
  %2005 = vmatpush1.xpose.msra.mxu0 %v686
  %2006 = vmatprep.subr.mxu0 0.0
  %2007 = vmatpush1.xpose.msra.mxu0 %v688
  %2008 = vmatprep.subr.mxu0 0.0
  %2009 = vmatpush1.xpose.msra.mxu0 %v690
  %2010 = vmatprep.subr.mxu0 0.0
  %2011 = vmatpush1.xpose.msra.mxu0 %v692
  %2012 = vmatprep.subr.mxu0 0.0
  %2013 = vmatpush1.xpose.msra.mxu0 %v694
  %2014 = vmatprep.subr.mxu0 0.0
  %2015 = vmatpush1.xpose.msra.mxu0 %v696
  %2016 = vmatprep.subr.mxu0 0.0
  %2017 = vmatpush1.xpose.msra.mxu0 %v698
  %2018 = vmatprep.subr.mxu0 0.0
  %2019 = vmatpush1.xpose.msra.mxu0 %v700
  %2020 = vmatprep.subr.mxu0 0.0
  %2021 = vmatpush1.xpose.msra.mxu0 %v702
  %2022 = vmatprep.subr.mxu0 0.0
  %2023 = vmatpush1.xpose.msra.mxu0 %v704
  %2024 = vmatprep.subr.mxu0 0.0
  %2025 = vmatpush1.xpose.msra.mxu0 %v706
  %2026 = vmatprep.subr.mxu0 0.0
  %2027 = vmatpush1.xpose.msra.mxu0 %v708
  %2028 = vmatprep.subr.mxu0 0.0
  %2029 = vmatpush1.xpose.msra.mxu0 %v710
  %2030 = vmatprep.subr.mxu0 0.0
  %2031 = vmatpush1.xpose.msra.mxu0 %v712
  %2032 = vmatprep.subr.mxu0 0.0
  %2033 = vmatpush1.xpose.msra.mxu0 %v714
  %2034 = vmatprep.subr.mxu0 0.0
  %2035 = vmatpush1.xpose.msra.mxu0 %v716
  %2036 = vmatprep.subr.mxu0 0.0
  %2037 = vmatpush1.xpose.msra.mxu0 %v718
  %2038 = vmatprep.subr.mxu0 0.0
  %2039 = vmatpush1.xpose.msra.mxu0 %v720
  %2040 = vmatprep.subr.mxu0 0.0
  %2041 = vmatpush1.xpose.msra.mxu0 %v722
  %2042 = vmatprep.subr.mxu0 0.0
  %2043 = vmatpush1.xpose.msra.mxu0 %v724
  %2044 = vmatprep.subr.mxu0 0.0
  %2045 = vmatpush1.xpose.msra.mxu0 %v726
  %2046 = vmatprep.subr.mxu0 0.0
  %2047 = vmatpush1.xpose.msra.mxu0 %v728
  %2048 = vmatprep.subr.mxu0 0.0
  %2049 = vmatpush1.xpose.msra.mxu0 %v730
  %2050 = vmatprep.subr.mxu0 0.0
  %2051 = vmatpush1.xpose.msra.mxu0 %v732
  %2052 = vmatprep.subr.mxu0 0.0
  %2053 = vmatpush1.xpose.msra.mxu0 %v734
  %2054 = vmatprep.subr.mxu0 0.0
  %2055 = vmatpush1.xpose.msra.mxu0 %v736
  %2056 = vmatprep.subr.mxu0 0.0
  %2057 = vmatpush1.xpose.msra.mxu0 %v738
  %2058 = vmatprep.subr.mxu0 0.0
  %2059 = vmatpush1.xpose.msra.mxu0 %v1428
  %2060 = vmatprep.subr.mxu0 0.0
  %2061 = vmatpush1.xpose.msra.mxu0 %v1431
  %2062 = vmatprep.subr.mxu0 0.0
  %2063 = vmatpush1.xpose.msra.mxu0 %v1991
  %2064 = vmatprep.subr.mxu0 0.0
  %2065 = vmatpush1.xpose.msra.mxu0 %v1994
  %2066 = vmatprep.mubr.f32.mxu0 0.0
  %2067 = vmatmul.mubr.f32.gmra.mrb[0].mxu0 %v1985
  %v2068 = vpop.f32.mrb[0].mxu0
  %v2069 = vadd.f32 0.0, %v2068
  %v2070 = vpop.f32.mrb[0].mxu0
  %v2071 = vadd.f32 0.0, %v2070
  %2072 = vmatprep.mubr.f32.mxu0 0.0
  %2073 = vmatmul.mubr.f32.gmra.mrb[0].mxu0 %v1988
  %v2074 = vpop.f32.mrb[0].mxu0
  %v2075 = vadd.f32 0.0, %v2074
  %v2076 = vpop.f32.mrb[0].mxu0
  %v2077 = vadd.f32 0.0, %v2076
  %2078 = vdwg.mxu0
  %2079 = vmatprep.subr.mxu0 0.0
  %2080 = vmatpush1.xpose.msra.mxu0 %v748
  %2081 = vmatprep.subr.mxu0 0.0
  %2082 = vmatpush1.xpose.msra.mxu0 %v750
  %2083 = vmatprep.subr.mxu0 0.0
  %2084 = vmatpush1.xpose.msra.mxu0 %v752
  %2085 = vmatprep.subr.mxu0 0.0
  %2086 = vmatpush1.xpose.msra.mxu0 %v754
  %2087 = vmatprep.subr.mxu0 0.0
  %2088 = vmatpush1.xpose.msra.mxu0 %v756
  %2089 = vmatprep.subr.mxu0 0.0
  %2090 = vmatpush1.xpose.msra.mxu0 %v758
  %2091 = vmatprep.subr.mxu0 0.0
  %2092 = vmatpush1.xpose.msra.mxu0 %v760
  %2093 = vmatprep.subr.mxu0 0.0
  %2094 = vmatpush1.xpose.msra.mxu0 %v762
  %2095 = vmatprep.subr.mxu0 0.0
  %2096 = vmatpush1.xpose.msra.mxu0 %v764
  %2097 = vmatprep.subr.mxu0 0.0
  %2098 = vmatpush1.xpose.msra.mxu0 %v766
  %2099 = vmatprep.subr.mxu0 0.0
  %2100 = vmatpush1.xpose.msra.mxu0 %v768
  %2101 = vmatprep.subr.mxu0 0.0
  %2102 = vmatpush1.xpose.msra.mxu0 %v770
  %2103 = vmatprep.subr.mxu0 0.0
  %2104 = vmatpush1.xpose.msra.mxu0 %v772
  %2105 = vmatprep.subr.mxu0 0.0
  %2106 = vmatpush1.xpose.msra.mxu0 %v774
  %2107 = vmatprep.subr.mxu0 0.0
  %2108 = vmatpush1.xpose.msra.mxu0 %v776
  %2109 = vmatprep.subr.mxu0 0.0
  %2110 = vmatpush1.xpose.msra.mxu0 %v778
  %2111 = vmatprep.subr.mxu0 0.0
  %2112 = vmatpush1.xpose.msra.mxu0 %v780
  %2113 = vmatprep.subr.mxu0 0.0
  %2114 = vmatpush1.xpose.msra.mxu0 %v782
  %2115 = vmatprep.subr.mxu0 0.0
  %2116 = vmatpush1.xpose.msra.mxu0 %v784
  %2117 = vmatprep.subr.mxu0 0.0
  %2118 = vmatpush1.xpose.msra.mxu0 %v786
  %2119 = vmatprep.subr.mxu0 0.0
  %2120 = vmatpush1.xpose.msra.mxu0 %v788
  %2121 = vmatprep.subr.mxu0 0.0
  %2122 = vmatpush1.xpose.msra.mxu0 %v790
  %2123 = vmatprep.subr.mxu0 0.0
  %2124 = vmatpush1.xpose.msra.mxu0 %v792
  %2125 = vmatprep.subr.mxu0 0.0
  %2126 = vmatpush1.xpose.msra.mxu0 %v794
  %2127 = vmatprep.subr.mxu0 0.0
  %2128 = vmatpush1.xpose.msra.mxu0 %v796
  %2129 = vmatprep.subr.mxu0 0.0
  %2130 = vmatpush1.xpose.msra.mxu0 %v798
  %2131 = vmatprep.subr.mxu0 0.0
  %2132 = vmatpush1.xpose.msra.mxu0 %v800
  %2133 = vmatprep.subr.mxu0 0.0
  %2134 = vmatpush1.xpose.msra.mxu0 %v802
  %2135 = vmatprep.subr.mxu0 0.0
  %2136 = vmatpush1.xpose.msra.mxu0 %v1434
  %2137 = vmatprep.subr.mxu0 0.0
  %2138 = vmatpush1.xpose.msra.mxu0 %v1437
  %2139 = vmatprep.subr.mxu0 0.0
  %2140 = vmatpush1.xpose.msra.mxu0 %v1997
  %2141 = vmatprep.subr.mxu0 0.0
  %2142 = vmatpush1.xpose.msra.mxu0 %v2000
  %2143 = vmatprep.mubr.f32.mxu0 0.0
  %2144 = vmatmul.mubr.f32.gmra.mrb[0].mxu0 %v1985
  %v2145 = vpop.f32.mrb[0].mxu0
  %v2146 = vadd.f32 0.0, %v2145
  %v2147 = vpop.f32.mrb[0].mxu0
  %v2148 = vadd.f32 0.0, %v2147
  %2149 = vmatprep.mubr.f32.mxu0 0.0
  %2150 = vmatmul.mubr.f32.gmra.mrb[0].mxu0 %v1988
  %v2151 = vpop.f32.mrb[0].mxu0
  %v2152 = vadd.f32 0.0, %v2151
  %v2153 = vpop.f32.mrb[0].mxu0
  %v2154 = vadd.f32 0.0, %v2153
  %2155 = vdwg.mxu0
  %v2156 = vadd.f32 %v1973, %v2069
  %v2157 = vadd.f32 %v1974, %v2071
  %v2158 = vadd.f32 %v1975, %v2146
  %v2159 = vadd.f32 %v1976, %v2148
  %v2160 = vadd.f32 %v1977, %v2075
  %v2161 = vadd.f32 %v1978, %v2077
  %v2162 = vadd.f32 %v1979, %v2152
  %v2163 = vadd.f32 %v1980, %v2154
  %v2166 = vrot.slane %v62, 1
  %v2167 = vrot.slane %v63, 1
  %v2168 = vsel %vm217, %v2166, %v2167
  %v2169 = vrot.slane %v64, 1
  %v2170 = vsel %vm217, %v2167, %v2169
  %v2171 = vrot.slane %v116, 1
  %v2172 = vrot.slane %v117, 1
  %v2173 = vsel %vm217, %v2171, %v2172
  %v2174 = vrot.slane %v118, 1
  %v2175 = vsel %vm217, %v2172, %v2174
  %s2176 = scalar_lea.vmem %s1, 112
  %v2177 = vld [vmem:[%s2176] sm:$0xff]
  %v2178 = vld [vmem:[%s2176 + $0x8] sm:$0xff]
  %v2180 = vsel %vm381, %v2177, 0
  %v2183 = vsel %vm381, %v2178, 0
  %v2185 = vsel %vm381, %v2168, 0
  %v2187 = vsel %vm381, %v2170, 0
  %v2189 = vsel %vm381, %v2173, 0
  %v2191 = vsel %vm381, %v2175, 0
  %2193 = vmatprep.subr.mxu0 0.0
  %2194 = vmatpush1.xpose.msra.mxu0 %v396
  %2195 = vmatprep.subr.mxu0 0.0
  %2196 = vmatpush1.xpose.msra.mxu0 %v398
  %2197 = vmatprep.subr.mxu0 0.0
  %2198 = vmatpush1.xpose.msra.mxu0 %v400
  %2199 = vmatprep.subr.mxu0 0.0
  %2200 = vmatpush1.xpose.msra.mxu0 %v402
  %2201 = vmatprep.subr.mxu0 0.0
  %2202 = vmatpush1.xpose.msra.mxu0 %v404
  %2203 = vmatprep.subr.mxu0 0.0
  %2204 = vmatpush1.xpose.msra.mxu0 %v406
  %2205 = vmatprep.subr.mxu0 0.0
  %2206 = vmatpush1.xpose.msra.mxu0 %v408
  %2207 = vmatprep.subr.mxu0 0.0
  %2208 = vmatpush1.xpose.msra.mxu0 %v410
  %2209 = vmatprep.subr.mxu0 0.0
  %2210 = vmatpush1.xpose.msra.mxu0 %v412
  %2211 = vmatprep.subr.mxu0 0.0
  %2212 = vmatpush1.xpose.msra.mxu0 %v414
  %2213 = vmatprep.subr.mxu0 0.0
  %2214 = vmatpush1.xpose.msra.mxu0 %v416
  %2215 = vmatprep.subr.mxu0 0.0
  %2216 = vmatpush1.xpose.msra.mxu0 %v418
  %2217 = vmatprep.subr.mxu0 0.0
  %2218 = vmatpush1.xpose.msra.mxu0 %v420
  %2219 = vmatprep.subr.mxu0 0.0
  %2220 = vmatpush1.xpose.msra.mxu0 %v422
  %2221 = vmatprep.subr.mxu0 0.0
  %2222 = vmatpush1.xpose.msra.mxu0 %v424
  %2223 = vmatprep.subr.mxu0 0.0
  %2224 = vmatpush1.xpose.msra.mxu0 %v426
  %2225 = vmatprep.subr.mxu0 0.0
  %2226 = vmatpush1.xpose.msra.mxu0 %v428
  %2227 = vmatprep.subr.mxu0 0.0
  %2228 = vmatpush1.xpose.msra.mxu0 %v430
  %2229 = vmatprep.subr.mxu0 0.0
  %2230 = vmatpush1.xpose.msra.mxu0 %v432
  %2231 = vmatprep.subr.mxu0 0.0
  %2232 = vmatpush1.xpose.msra.mxu0 %v434
  %2233 = vmatprep.subr.mxu0 0.0
  %2234 = vmatpush1.xpose.msra.mxu0 %v436
  %2235 = vmatprep.subr.mxu0 0.0
  %2236 = vmatpush1.xpose.msra.mxu0 %v438
  %2237 = vmatprep.subr.mxu0 0.0
  %2238 = vmatpush1.xpose.msra.mxu0 %v440
  %2239 = vmatprep.subr.mxu0 0.0
  %2240 = vmatpush1.xpose.msra.mxu0 %v442
  %2241 = vmatprep.subr.mxu0 0.0
  %2242 = vmatpush1.xpose.msra.mxu0 %v444
  %2243 = vmatprep.subr.mxu0 0.0
  %2244 = vmatpush1.xpose.msra.mxu0 %v446
  %2245 = vmatprep.subr.mxu0 0.0
  %2246 = vmatpush1.xpose.msra.mxu0 %v448
  %2247 = vmatprep.subr.mxu0 0.0
  %2248 = vmatpush1.xpose.msra.mxu0 %v450
  %2249 = vmatprep.subr.mxu0 0.0
  %2250 = vmatpush1.xpose.msra.mxu0 %v1622
  %2251 = vmatprep.subr.mxu0 0.0
  %2252 = vmatpush1.xpose.msra.mxu0 %v1624
  %2253 = vmatprep.subr.mxu0 0.0
  %2254 = vmatpush1.xpose.msra.mxu0 %v2185
  %2255 = vmatprep.subr.mxu0 0.0
  %2256 = vmatpush1.xpose.msra.mxu0 %v2187
  %2257 = vmatprep.mubr.f32.mxu0 0.0
  %2258 = vmatmul.mubr.f32.gmra.mrb[0].mxu0 %v2180
  %v2259 = vpop.f32.mrb[0].mxu0
  %v2260 = vadd.f32 0.0, %v2259
  %v2261 = vpop.f32.mrb[0].mxu0
  %v2262 = vadd.f32 0.0, %v2261
  %2263 = vmatprep.mubr.f32.mxu0 0.0
  %2264 = vmatmul.mubr.f32.gmra.mrb[0].mxu0 %v2183
  %v2265 = vpop.f32.mrb[0].mxu0
  %v2266 = vadd.f32 0.0, %v2265
  %v2267 = vpop.f32.mrb[0].mxu0
  %v2268 = vadd.f32 0.0, %v2267
  %2269 = vdwg.mxu0
  %2270 = vmatprep.subr.mxu0 0.0
  %2271 = vmatpush1.xpose.msra.mxu0 %v460
  %2272 = vmatprep.subr.mxu0 0.0
  %2273 = vmatpush1.xpose.msra.mxu0 %v462
  %2274 = vmatprep.subr.mxu0 0.0
  %2275 = vmatpush1.xpose.msra.mxu0 %v464
  %2276 = vmatprep.subr.mxu0 0.0
  %2277 = vmatpush1.xpose.msra.mxu0 %v466
  %2278 = vmatprep.subr.mxu0 0.0
  %2279 = vmatpush1.xpose.msra.mxu0 %v468
  %2280 = vmatprep.subr.mxu0 0.0
  %2281 = vmatpush1.xpose.msra.mxu0 %v470
  %2282 = vmatprep.subr.mxu0 0.0
  %2283 = vmatpush1.xpose.msra.mxu0 %v472
  %2284 = vmatprep.subr.mxu0 0.0
  %2285 = vmatpush1.xpose.msra.mxu0 %v474
  %2286 = vmatprep.subr.mxu0 0.0
  %2287 = vmatpush1.xpose.msra.mxu0 %v476
  %2288 = vmatprep.subr.mxu0 0.0
  %2289 = vmatpush1.xpose.msra.mxu0 %v478
  %2290 = vmatprep.subr.mxu0 0.0
  %2291 = vmatpush1.xpose.msra.mxu0 %v480
  %2292 = vmatprep.subr.mxu0 0.0
  %2293 = vmatpush1.xpose.msra.mxu0 %v482
  %2294 = vmatprep.subr.mxu0 0.0
  %2295 = vmatpush1.xpose.msra.mxu0 %v484
  %2296 = vmatprep.subr.mxu0 0.0
  %2297 = vmatpush1.xpose.msra.mxu0 %v486
  %2298 = vmatprep.subr.mxu0 0.0
  %2299 = vmatpush1.xpose.msra.mxu0 %v488
  %2300 = vmatprep.subr.mxu0 0.0
  %2301 = vmatpush1.xpose.msra.mxu0 %v490
  %2302 = vmatprep.subr.mxu0 0.0
  %2303 = vmatpush1.xpose.msra.mxu0 %v492
  %2304 = vmatprep.subr.mxu0 0.0
  %2305 = vmatpush1.xpose.msra.mxu0 %v494
  %2306 = vmatprep.subr.mxu0 0.0
  %2307 = vmatpush1.xpose.msra.mxu0 %v496
  %2308 = vmatprep.subr.mxu0 0.0
  %2309 = vmatpush1.xpose.msra.mxu0 %v498
  %2310 = vmatprep.subr.mxu0 0.0
  %2311 = vmatpush1.xpose.msra.mxu0 %v500
  %2312 = vmatprep.subr.mxu0 0.0
  %2313 = vmatpush1.xpose.msra.mxu0 %v502
  %2314 = vmatprep.subr.mxu0 0.0
  %2315 = vmatpush1.xpose.msra.mxu0 %v504
  %2316 = vmatprep.subr.mxu0 0.0
  %2317 = vmatpush1.xpose.msra.mxu0 %v506
  %2318 = vmatprep.subr.mxu0 0.0
  %2319 = vmatpush1.xpose.msra.mxu0 %v508
  %2320 = vmatprep.subr.mxu0 0.0
  %2321 = vmatpush1.xpose.msra.mxu0 %v510
  %2322 = vmatprep.subr.mxu0 0.0
  %2323 = vmatpush1.xpose.msra.mxu0 %v512
  %2324 = vmatprep.subr.mxu0 0.0
  %2325 = vmatpush1.xpose.msra.mxu0 %v514
  %2326 = vmatprep.subr.mxu0 0.0
  %2327 = vmatpush1.xpose.msra.mxu0 %v1626
  %2328 = vmatprep.subr.mxu0 0.0
  %2329 = vmatpush1.xpose.msra.mxu0 %v1628
  %2330 = vmatprep.subr.mxu0 0.0
  %2331 = vmatpush1.xpose.msra.mxu0 %v2189
  %2332 = vmatprep.subr.mxu0 0.0
  %2333 = vmatpush1.xpose.msra.mxu0 %v2191
  %2334 = vmatprep.mubr.f32.mxu0 0.0
  %2335 = vmatmul.mubr.f32.gmra.mrb[0].mxu0 %v2180
  %v2336 = vpop.f32.mrb[0].mxu0
  %v2337 = vadd.f32 0.0, %v2336
  %v2338 = vpop.f32.mrb[0].mxu0
  %v2339 = vadd.f32 0.0, %v2338
  %2340 = vmatprep.mubr.f32.mxu0 0.0
  %2341 = vmatmul.mubr.f32.gmra.mrb[0].mxu0 %v2183
  %v2342 = vpop.f32.mrb[0].mxu0
  %v2343 = vadd.f32 0.0, %v2342
  %v2344 = vpop.f32.mrb[0].mxu0
  %v2345 = vadd.f32 0.0, %v2344
  %2346 = vdwg.mxu0
  %v2347 = vadd.f32 %v2156, %v2260
  %v2348 = vadd.f32 %v2157, %v2262
  %v2349 = vadd.f32 %v2158, %v2337
  %v2350 = vadd.f32 %v2159, %v2339
  %v2351 = vadd.f32 %v2160, %v2266
  %v2352 = vadd.f32 %v2161, %v2268
  %v2353 = vadd.f32 %v2162, %v2343
  %v2354 = vadd.f32 %v2163, %v2345
  %v2355 = vrot.slane %v62, 2
  %v2356 = vrot.slane %v63, 2
  %v2357 = vsel %vm958, %v2355, %v2356
  %v2358 = vrot.slane %v64, 2
  %v2359 = vsel %vm958, %v2356, %v2358
  %v2360 = vrot.slane %v116, 2
  %v2361 = vrot.slane %v117, 2
  %v2362 = vsel %vm958, %v2360, %v2361
  %v2363 = vrot.slane %v118, 2
  %v2364 = vsel %vm958, %v2361, %v2363
  %s2365 = scalar_lea.vmem %s1, 128
  %v2366 = vld [vmem:[%s2365] sm:$0xff]
  %v2367 = vld [vmem:[%s2365 + $0x8] sm:$0xff]
  %v2369 = vsel %vm381, %v2366, 0
  %v2372 = vsel %vm381, %v2367, 0
  %v2374 = vsel %vm381, %v2357, 0
  %v2376 = vsel %vm381, %v2359, 0
  %v2378 = vsel %vm381, %v2362, 0
  %v2380 = vsel %vm381, %v2364, 0
  %2382 = vmatprep.subr.mxu0 0.0
  %2383 = vmatpush1.xpose.msra.mxu0 %v1136
  %2384 = vmatprep.subr.mxu0 0.0
  %2385 = vmatpush1.xpose.msra.mxu0 %v1138
  %2386 = vmatprep.subr.mxu0 0.0
  %2387 = vmatpush1.xpose.msra.mxu0 %v1140
  %2388 = vmatprep.subr.mxu0 0.0
  %2389 = vmatpush1.xpose.msra.mxu0 %v1142
  %2390 = vmatprep.subr.mxu0 0.0
  %2391 = vmatpush1.xpose.msra.mxu0 %v1144
  %2392 = vmatprep.subr.mxu0 0.0
  %2393 = vmatpush1.xpose.msra.mxu0 %v1146
  %2394 = vmatprep.subr.mxu0 0.0
  %2395 = vmatpush1.xpose.msra.mxu0 %v1148
  %2396 = vmatprep.subr.mxu0 0.0
  %2397 = vmatpush1.xpose.msra.mxu0 %v1150
  %2398 = vmatprep.subr.mxu0 0.0
  %2399 = vmatpush1.xpose.msra.mxu0 %v1152
  %2400 = vmatprep.subr.mxu0 0.0
  %2401 = vmatpush1.xpose.msra.mxu0 %v1154
  %2402 = vmatprep.subr.mxu0 0.0
  %2403 = vmatpush1.xpose.msra.mxu0 %v1156
  %2404 = vmatprep.subr.mxu0 0.0
  %2405 = vmatpush1.xpose.msra.mxu0 %v1158
  %2406 = vmatprep.subr.mxu0 0.0
  %2407 = vmatpush1.xpose.msra.mxu0 %v1160
  %2408 = vmatprep.subr.mxu0 0.0
  %2409 = vmatpush1.xpose.msra.mxu0 %v1162
  %2410 = vmatprep.subr.mxu0 0.0
  %2411 = vmatpush1.xpose.msra.mxu0 %v1164
  %2412 = vmatprep.subr.mxu0 0.0
  %2413 = vmatpush1.xpose.msra.mxu0 %v1166
  %2414 = vmatprep.subr.mxu0 0.0
  %2415 = vmatpush1.xpose.msra.mxu0 %v1168
  %2416 = vmatprep.subr.mxu0 0.0
  %2417 = vmatpush1.xpose.msra.mxu0 %v1170
  %2418 = vmatprep.subr.mxu0 0.0
  %2419 = vmatpush1.xpose.msra.mxu0 %v1172
  %2420 = vmatprep.subr.mxu0 0.0
  %2421 = vmatpush1.xpose.msra.mxu0 %v1174
  %2422 = vmatprep.subr.mxu0 0.0
  %2423 = vmatpush1.xpose.msra.mxu0 %v1176
  %2424 = vmatprep.subr.mxu0 0.0
  %2425 = vmatpush1.xpose.msra.mxu0 %v1178
  %2426 = vmatprep.subr.mxu0 0.0
  %2427 = vmatpush1.xpose.msra.mxu0 %v1180
  %2428 = vmatprep.subr.mxu0 0.0
  %2429 = vmatpush1.xpose.msra.mxu0 %v1182
  %2430 = vmatprep.subr.mxu0 0.0
  %2431 = vmatpush1.xpose.msra.mxu0 %v1184
  %2432 = vmatprep.subr.mxu0 0.0
  %2433 = vmatpush1.xpose.msra.mxu0 %v1186
  %2434 = vmatprep.subr.mxu0 0.0
  %2435 = vmatpush1.xpose.msra.mxu0 %v1188
  %2436 = vmatprep.subr.mxu0 0.0
  %2437 = vmatpush1.xpose.msra.mxu0 %v1190
  %2438 = vmatprep.subr.mxu0 0.0
  %2439 = vmatpush1.xpose.msra.mxu0 %v1811
  %2440 = vmatprep.subr.mxu0 0.0
  %2441 = vmatpush1.xpose.msra.mxu0 %v1813
  %2442 = vmatprep.subr.mxu0 0.0
  %2443 = vmatpush1.xpose.msra.mxu0 %v2374
  %2444 = vmatprep.subr.mxu0 0.0
  %2445 = vmatpush1.xpose.msra.mxu0 %v2376
  %2446 = vmatprep.mubr.f32.mxu0 0.0
  %2447 = vmatmul.mubr.f32.gmra.mrb[0].mxu0 %v2369
  %v2448 = vpop.f32.mrb[0].mxu0
  %v2449 = vadd.f32 0.0, %v2448
  %v2450 = vpop.f32.mrb[0].mxu0
  %v2451 = vadd.f32 0.0, %v2450
  %2452 = vmatprep.mubr.f32.mxu0 0.0
  %2453 = vmatmul.mubr.f32.gmra.mrb[0].mxu0 %v2372
  %v2454 = vpop.f32.mrb[0].mxu0
  %v2455 = vadd.f32 0.0, %v2454
  %v2456 = vpop.f32.mrb[0].mxu0
  %v2457 = vadd.f32 0.0, %v2456
  %2458 = vdwg.mxu0
  %2459 = vmatprep.subr.mxu0 0.0
  %2460 = vmatpush1.xpose.msra.mxu0 %v1200
  %2461 = vmatprep.subr.mxu0 0.0
  %2462 = vmatpush1.xpose.msra.mxu0 %v1202
  %2463 = vmatprep.subr.mxu0 0.0
  %2464 = vmatpush1.xpose.msra.mxu0 %v1204
  %2465 = vmatprep.subr.mxu0 0.0
  %2466 = vmatpush1.xpose.msra.mxu0 %v1206
  %2467 = vmatprep.subr.mxu0 0.0
  %2468 = vmatpush1.xpose.msra.mxu0 %v1208
  %2469 = vmatprep.subr.mxu0 0.0
  %2470 = vmatpush1.xpose.msra.mxu0 %v1210
  %2471 = vmatprep.subr.mxu0 0.0
  %2472 = vmatpush1.xpose.msra.mxu0 %v1212
  %2473 = vmatprep.subr.mxu0 0.0
  %2474 = vmatpush1.xpose.msra.mxu0 %v1214
  %2475 = vmatprep.subr.mxu0 0.0
  %2476 = vmatpush1.xpose.msra.mxu0 %v1216
  %2477 = vmatprep.subr.mxu0 0.0
  %2478 = vmatpush1.xpose.msra.mxu0 %v1218
  %2479 = vmatprep.subr.mxu0 0.0
  %2480 = vmatpush1.xpose.msra.mxu0 %v1220
  %2481 = vmatprep.subr.mxu0 0.0
  %2482 = vmatpush1.xpose.msra.mxu0 %v1222
  %2483 = vmatprep.subr.mxu0 0.0
  %2484 = vmatpush1.xpose.msra.mxu0 %v1224
  %2485 = vmatprep.subr.mxu0 0.0
  %2486 = vmatpush1.xpose.msra.mxu0 %v1226
  %2487 = vmatprep.subr.mxu0 0.0
  %2488 = vmatpush1.xpose.msra.mxu0 %v1228
  %2489 = vmatprep.subr.mxu0 0.0
  %2490 = vmatpush1.xpose.msra.mxu0 %v1230
  %2491 = vmatprep.subr.mxu0 0.0
  %2492 = vmatpush1.xpose.msra.mxu0 %v1232
  %2493 = vmatprep.subr.mxu0 0.0
  %2494 = vmatpush1.xpose.msra.mxu0 %v1234
  %2495 = vmatprep.subr.mxu0 0.0
  %2496 = vmatpush1.xpose.msra.mxu0 %v1236
  %2497 = vmatprep.subr.mxu0 0.0
  %2498 = vmatpush1.xpose.msra.mxu0 %v1238
  %2499 = vmatprep.subr.mxu0 0.0
  %2500 = vmatpush1.xpose.msra.mxu0 %v1240
  %2501 = vmatprep.subr.mxu0 0.0
  %2502 = vmatpush1.xpose.msra.mxu0 %v1242
  %2503 = vmatprep.subr.mxu0 0.0
  %2504 = vmatpush1.xpose.msra.mxu0 %v1244
  %2505 = vmatprep.subr.mxu0 0.0
  %2506 = vmatpush1.xpose.msra.mxu0 %v1246
  %2507 = vmatprep.subr.mxu0 0.0
  %2508 = vmatpush1.xpose.msra.mxu0 %v1248
  %2509 = vmatprep.subr.mxu0 0.0
  %2510 = vmatpush1.xpose.msra.mxu0 %v1250
  %2511 = vmatprep.subr.mxu0 0.0
  %2512 = vmatpush1.xpose.msra.mxu0 %v1252
  %2513 = vmatprep.subr.mxu0 0.0
  %2514 = vmatpush1.xpose.msra.mxu0 %v1254
  %2515 = vmatprep.subr.mxu0 0.0
  %2516 = vmatpush1.xpose.msra.mxu0 %v1815
  %2517 = vmatprep.subr.mxu0 0.0
  %2518 = vmatpush1.xpose.msra.mxu0 %v1817
  %2519 = vmatprep.subr.mxu0 0.0
  %2520 = vmatpush1.xpose.msra.mxu0 %v2378
  %2521 = vmatprep.subr.mxu0 0.0
  %2522 = vmatpush1.xpose.msra.mxu0 %v2380
  %2523 = vmatprep.mubr.f32.mxu0 0.0
  %2524 = vmatmul.mubr.f32.gmra.mrb[0].mxu0 %v2369
  %v2525 = vpop.f32.mrb[0].mxu0
  %v2526 = vadd.f32 0.0, %v2525
  %v2527 = vpop.f32.mrb[0].mxu0
  %v2528 = vadd.f32 0.0, %v2527
  %2529 = vmatprep.mubr.f32.mxu0 0.0
  %2530 = vmatmul.mubr.f32.gmra.mrb[0].mxu0 %v2372
  %v2531 = vpop.f32.mrb[0].mxu0
  %v2532 = vadd.f32 0.0, %v2531
  %v2533 = vpop.f32.mrb[0].mxu0
  %v2534 = vadd.f32 0.0, %v2533
  %2535 = vdwg.mxu0
  %v2536 = vadd.f32 %v2347, %v2449
  %v2537 = vadd.f32 %v2348, %v2451
  %v2538 = vadd.f32 %v2349, %v2526
  %v2539 = vadd.f32 %v2350, %v2528
  %v2540 = vadd.f32 %v2351, %v2455
  %v2541 = vadd.f32 %v2352, %v2457
  %v2542 = vadd.f32 %v2353, %v2532
  %v2543 = vadd.f32 %v2354, %v2534
  %v2544 = vadd.f32 %v2536, %v2537
  %v2545 = vadd.f32 %v2544, %v2538
  %v2546 = vadd.f32 %v2545, %v2539
  %2547 = vadd.xlane.f32.xlu0 %v2546
  %v2548 = vpop.xlane.xlu0 %2547
  %v2549 = vadd.f32 %v2540, %v2541
  %v2550 = vadd.f32 %v2549, %v2542
  %v2551 = vadd.f32 %v2550, %v2543
  %2552 = vadd.xlane.f32.xlu0 %v2551
  %v2553 = vpop.xlane.xlu0 %2552
  %v2554 = vrcp.pop 512.0
  %v2555 = vmul.f32 %v2548, %v2554
  %v2556 = vmul.f32 %v2553, %v2554
  %v2557 = vsub.f32 %v2536, %v2555
  %v2558 = vsub.f32 %v2537, %v2555
  %v2559 = vsub.f32 %v2538, %v2555
  %v2560 = vsub.f32 %v2539, %v2555
  %v2561 = vsub.f32 %v2540, %v2556
  %v2562 = vsub.f32 %v2541, %v2556
  %v2563 = vsub.f32 %v2542, %v2556
  %v2564 = vsub.f32 %v2543, %v2556
  %v2565 = vmul.f32 %v2557, %v2557
  %v2566 = vmul.f32 %v2558, %v2558
  %v2567 = vmul.f32 %v2559, %v2559
  %v2568 = vmul.f32 %v2560, %v2560
  %v2569 = vmul.f32 %v2561, %v2561
  %v2570 = vmul.f32 %v2562, %v2562
  %v2571 = vmul.f32 %v2563, %v2563
  %v2572 = vmul.f32 %v2564, %v2564
  %v2573 = vadd.f32 %v2565, %v2566
  %v2574 = vadd.f32 %v2573, %v2567
  %v2575 = vadd.f32 %v2574, %v2568
  %2576 = vadd.xlane.f32.xlu0 %v2575
  %v2577 = vpop.xlane.xlu0 %2576
  %v2578 = vadd.f32 %v2569, %v2570
  %v2579 = vadd.f32 %v2578, %v2571
  %v2580 = vadd.f32 %v2579, %v2572
  %2581 = vadd.xlane.f32.xlu0 %v2580
  %v2582 = vpop.xlane.xlu0 %2581
  %v2583 = vmul.f32 %v2577, %v2554
  %v2584 = vmul.f32 %v2582, %v2554
  %v2585 = vadd.f32 %v2583, 1e-05
  %v2586 = vadd.f32 %v2584, 1e-05
  %v2587 = vrsqrt.pop %v2585
  %v2588 = vrsqrt.pop %v2586
  %v2589 = vmul.f32 %v2557, %v2587
  %v2590 = vmul.f32 %v2558, %v2587
  %v2591 = vmul.f32 %v2559, %v2587
  %v2592 = vmul.f32 %v2560, %v2587
  %v2593 = vmul.f32 %v2561, %v2588
  %v2594 = vmul.f32 %v2562, %v2588
  %v2595 = vmul.f32 %v2563, %v2588
  %v2596 = vmul.f32 %v2564, %v2588
  %v2597 = vmax.f32 %v2589, 0.0
  %v2598 = vmax.f32 %v2590, 0.0
  %v2599 = vmax.f32 %v2591, 0.0
  %v2600 = vmax.f32 %v2592, 0.0
  %v2601 = vmax.f32 %v2593, 0.0
  %v2602 = vmax.f32 %v2594, 0.0
  %v2603 = vmax.f32 %v2595, 0.0
  %v2604 = vmax.f32 %v2596, 0.0
  %2605 = vst [vmem:[%s2] sm:$0xff] %v2597
  %2606 = vst [vmem:[%s2 + $0x8] sm:$0xff] %v2598
  %2607 = vst [vmem:[%s2 + $0x10] sm:$0xff] %v2599
  %2608 = vst [vmem:[%s2 + $0x18] sm:$0xff] %v2600
  %2609 = vst [vmem:[%s2 + $0x20] sm:$0xff] %v2601
  %2610 = vst [vmem:[%s2 + $0x28] sm:$0xff] %v2602
  %2611 = vst [vmem:[%s2 + $0x30] sm:$0xff] %v2603
  %2612 = vst [vmem:[%s2 + $0x38] sm:$0xff] %v2604
  // Predicated region
  $region10: #{conv_block.1} parent=0 // pred_check
    _
  $region11: #{conv_block.1} parent=0 // pred_check_branch
    %2614 = sbr.rel (0) target = $region13
  $region12: #{conv_block.1} parent=0 // pred_region
    _
  $region13: #{conv_block.1} parent=0 // pred_fallthru
    _
  // Predicated region
  $region14: #{conv_block.1} parent=0 // pred_check
    _
  $region15: #{conv_block.1} parent=0 // pred_check_branch
    %2616 = sbr.rel (0) target = $region17
  $region16: #{conv_block.1} parent=0 // pred_region
    _
  $region17: #{conv_block.1} parent=0 // pred_fallthru
    _

</llo_original>
